<compile_context>
chip_gen: v7x
topology: tpu7x:2x2x1
jax: 0.10.0
libtpu: 0.0.40
codegen_flags: <defaults>
</compile_context>

<pallas_src>
import jax
import jax.numpy as jnp
from jax import lax
from jax.experimental import pallas as pl
from jax.experimental.pallas import tpu as pltpu


def _head_kernel(q_ref, k_ref, v_ref,
                 w1t_ref, w2t_ref, w3t_ref,
                 b1_ref, b2_ref, b3_ref,
                 o_ref,
                 q_acc, k_acc, v_acc):
    """Grid = (heads, K_tiles).

    Per contraction step: stream a (tk, D) slab of each pre-transposed weight,
    accumulate the three Linear projections into persistent f32 VMEM scratch.
    Step 0 initializes the accumulators with the (broadcast) biases; the last
    step runs softmax((Q K^T) * sqrt(D)) @ V and writes the output tile.
    """
    kstep = pl.program_id(1)

    @pl.when(kstep == 0)
    def _init():
        # Fold the Linear biases into accumulator init (bias blocks are only
        # DMA'd once per head since their index_map is constant over kstep).
        shape = q_acc.shape
        q_acc[...] = jnp.broadcast_to(b1_ref[0].astype(jnp.float32), shape)
        k_acc[...] = jnp.broadcast_to(b2_ref[0].astype(jnp.float32), shape)
        v_acc[...] = jnp.broadcast_to(b3_ref[0].astype(jnp.float32), shape)

    # (b, tk) @ (tk, D) -> (b, D); operands stay in native dtype (bf16 ok),
    # accumulation is f32 on the MXU.
    q_acc[...] += jnp.dot(q_ref[0], w1t_ref[0], preferred_element_type=jnp.float32)
    k_acc[...] += jnp.dot(k_ref[0], w2t_ref[0], preferred_element_type=jnp.float32)
    v_acc[...] += jnp.dot(v_ref[0], w3t_ref[0], preferred_element_type=jnp.float32)

    @pl.when(kstep == pl.num_programs(1) - 1)
    def _finalize():
        Q = q_acc[...]                   # (b, D), f32, bias already included
        K = k_acc[...]
        V = v_acc[...]

        D = Q.shape[-1]
        scale = jnp.float32(D) ** 0.5    # divide by p = 1/sqrt(D)  ==  * sqrt(D)

        # Q @ K^T without an explicit in-kernel transpose.
        s = lax.dot_general(Q, K, (((1,), (1,)), ((), ())),
                            preferred_element_type=jnp.float32) * scale   # (b, b)
        s = s - jnp.max(s, axis=-1, keepdims=True)
        e = jnp.exp(s)
        attn = e * pl.reciprocal(jnp.sum(e, axis=-1, keepdims=True), approx=True)

        out = jnp.dot(attn, V, preferred_element_type=jnp.float32)        # (b, D)
        o_ref[0] = out.astype(o_ref.dtype)


def _pick_tk(D, itemsize, max_tk=None):
    """Contraction tile for the Linear layers: a multiple of 128 that divides D,
    sized so the double-buffered three-weight slab stays <= ~24 MiB (fits the
    v7x 64 MiB VMEM with headroom; larger chips simply pipeline deeper)."""
    if D % 128 != 0:
        return D                         # small / odd feature dims: single slab
    budget = 24 * 1024 * 1024            # 2 buffers * 3 weights * tk * D * itemsize
    tk = (budget // (6 * D * itemsize)) // 128 * 128
    tk = int(min(max(tk, 128), D))
    if max_tk is not None:
        tk = max(128, (min(tk, max_tk) // 128) * 128)
    while D % tk != 0:
        tk -= 128
    return tk


def mutil_cross_attention(query, key, value, params, heads, *, tk=None):
    """query/key/value: (b, c, h, w).  params: dict of per-head stacked weights
    in PyTorch layout (w*: (heads, D_out, D_in), b*: (heads, 1, D))."""
    b, c, h, w = query.shape
    assert c % heads == 0
    D = (c // heads) * h * w

    def to_heads(x):
        # (b, c, h, w) -> (heads, b, D).  The (b, heads, D) reshape is free on
        # contiguous NCHW; only the head-major transpose materializes, which is
        # negligible next to streaming the 3*heads*D^2 weights.
        return jnp.transpose(x.reshape(b, heads, D), (1, 0, 2))

    qh, kh, vh = to_heads(query), to_heads(key), to_heads(value)

    # Pre-transpose weights once in the wrapper: (heads, D_out, D_in) ->
    # (heads, D_in, D_out) so the kernel does a natural (b, tk) x (tk, D)
    # contraction and the XLU is never touched for weights.
    w1t = jnp.swapaxes(params["w1"], 1, 2)
    w2t = jnp.swapaxes(params["w2"], 1, 2)
    w3t = jnp.swapaxes(params["w3"], 1, 2)
    b1, b2, b3 = params["b1"], params["b2"], params["b3"]

    w_itemsize = jnp.dtype(w1t.dtype).itemsize
    x_itemsize = jnp.dtype(query.dtype).itemsize
    tk = _pick_tk(D, w_itemsize, max_tk=tk)
    k_tiles = D // tk

    x_spec = pl.BlockSpec((1, b, tk), lambda i, k: (i, 0, k))
    w_spec = pl.BlockSpec((1, tk, D), lambda i, k: (i, k, 0))
    bias_spec = pl.BlockSpec((1, 1, D), lambda i, k: (i, 0, 0))
    out_spec = pl.BlockSpec((1, b, D), lambda i, k: (i, 0, 0))

    cost = pl.CostEstimate(
        flops=2 * heads * (3 * b * D * D + 2 * b * b * D),
        transcendentals=heads * b * b,
        bytes_accessed=w_itemsize * heads * (3 * D * D + 3 * D)
        + x_itemsize * heads * 4 * b * D,
    )

    out = pl.pallas_call(
        _head_kernel,
        out_shape=jax.ShapeDtypeStruct((heads, b, D), query.dtype),
        grid_spec=pltpu.PrefetchScalarGridSpec(
            num_scalar_prefetch=0,
            grid=(heads, k_tiles),
            in_specs=[x_spec, x_spec, x_spec,
                      w_spec, w_spec, w_spec,
                      bias_spec, bias_spec, bias_spec],
            out_specs=out_spec,
            scratch_shapes=[pltpu.VMEM((b, D), jnp.float32)] * 3,
        ),
        compiler_params=pltpu.CompilerParams(
            dimension_semantics=("parallel", "arbitrary"),
            vmem_limit_bytes=48 * 1024 * 1024,
        ),
        cost_estimate=cost,
    )(qh, kh, vh, w1t, w2t, w3t, b1, b2, b3)

    # torch.cat(features, dim=-1).view(b, c, h, w)
    out = jnp.transpose(out, (1, 0, 2))            # (b, heads, D)
    return out.reshape(b, c, h, w)


def init_params(key, heads, D, dtype=jnp.float32):
    """Deterministic init mimicking nn.Linear defaults (uniform +-1/sqrt(fan_in))."""
    bound = 1.0 / (D ** 0.5)
    keys = jax.random.split(key, 6)
    mk = lambda k, shape: jax.random.uniform(k, shape, dtype, -bound, bound)
    return {
        "w1": mk(keys[0], (heads, D, D)), "b1": mk(keys[1], (heads, 1, D)),
        "w2": mk(keys[2], (heads, D, D)), "b2": mk(keys[3], (heads, 1, D)),
        "w3": mk(keys[4], (heads, D, D)), "b3": mk(keys[5], (heads, 1, D)),
    }


def reference(query, key, value, params, heads):
    """Pure-JAX reference of the PyTorch forward pass (for validation)."""
    b, c, h, w = query.shape
    D = (c // heads) * h * w
    feats = []
    for i in range(heads):
        sl = slice(i * (c // heads), (i + 1) * (c // heads))
        q = query[:, sl].reshape(b, -1)
        k = key[:, sl].reshape(b, -1)
        v = value[:, sl].reshape(b, -1)
        Q = q @ params["w1"][i].T + params["b1"][i][0]
        K = k @ params["w2"][i].T + params["b2"][i][0]
        V = v @ params["w3"][i].T + params["b3"][i][0]
        s = (Q @ K.T) * (D ** 0.5)
        a = jax.nn.softmax(s, axis=-1)
        feats.append(a @ V)
    return jnp.concatenate(feats, axis=-1).reshape(b, c, h, w)


if __name__ == "__main__":
    # Small shapes consistent with the module: heads divides channels, and each
    # head's Linear operates on D = (c//heads)*h*w features (here D = 512, a
    # lane-dense multiple of 128).
    b, c, h, w = 2, 4, 16, 16
    heads = 2
    D = (c // heads) * h * w   # 512

    key = jax.random.PRNGKey(0)
    kq, kk, kv, kp = jax.random.split(key, 4)
    query = jax.random.normal(kq, (b, c, h, w), jnp.float32)
    key_in = jax.random.normal(kk, (b, c, h, w), jnp.float32)
    value = jax.random.normal(kv, (b, c, h, w), jnp.float32)

    params = init_params(kp, heads, D)
    ref = reference(query, key_in, value, params, heads)

    # 1) tk=128 forces 4 contraction steps so the bias-init / accumulate /
    #    finalize pipeline is exercised even at these toy shapes.
    out_tiled = mutil_cross_attention(query, key_in, value, params, heads, tk=128)
    out_tiled = jax.block_until_ready(out_tiled)
    assert out_tiled.shape == (b, c, h, w)
    # approx reciprocal on the softmax denominator -> slightly looser tolerance.
    assert jnp.allclose(out_tiled, ref, atol=1e-2, rtol=1e-2), "tiled mismatch vs reference"

    # 2) Default tile selection (single (D, D) slab per weight here) exercises
    #    the k_tiles == 1 path where init/accumulate/finalize share one step.
    out_full = mutil_cross_attention(query, key_in, value, params, heads)
    out_full = jax.block_until_ready(out_full)
    assert jnp.allclose(out_full, ref, atol=1e-2, rtol=1e-2), "full-slab mismatch vs reference"

    print("KERNEL_OK")
</pallas_src>

<mosaic_0001>
module attributes {stable_mosaic.version = 11 : i64} {
  func.func @_head_kernel(%arg0: i32, %arg1: i32, %arg2: memref<1x2x128xf32, #tpu.memory_space<vmem>>, %arg3: memref<1x2x128xf32, #tpu.memory_space<vmem>>, %arg4: memref<1x2x128xf32, #tpu.memory_space<vmem>>, %arg5: memref<1x128x512xf32, #tpu.memory_space<vmem>>, %arg6: memref<1x128x512xf32, #tpu.memory_space<vmem>>, %arg7: memref<1x128x512xf32, #tpu.memory_space<vmem>>, %arg8: memref<1x1x512xf32, #tpu.memory_space<vmem>>, %arg9: memref<1x1x512xf32, #tpu.memory_space<vmem>>, %arg10: memref<1x1x512xf32, #tpu.memory_space<vmem>>, %arg11: memref<1x2x512xf32, #tpu.memory_space<vmem>>, %arg12: memref<2x512xf32, #tpu.memory_space<vmem>>, %arg13: memref<2x512xf32, #tpu.memory_space<vmem>>, %arg14: memref<2x512xf32, #tpu.memory_space<vmem>>) attributes {dimension_semantics = [#tpu.dimension_semantics<parallel>, #tpu.dimension_semantics<arbitrary>], iteration_bounds = array<i64: 2, 4>, scalar_prefetch = 0 : i64, scratch_operands = 3 : i64, tpu.core_type = #tpu.core_type<tc>, window_params = [{transform_indices = @transform_0, window_bounds = array<i64: 1, 2, 128>}, {transform_indices = @transform_1, window_bounds = array<i64: 1, 2, 128>}, {transform_indices = @transform_2, window_bounds = array<i64: 1, 2, 128>}, {transform_indices = @transform_3, window_bounds = array<i64: 1, 128, 512>}, {transform_indices = @transform_4, window_bounds = array<i64: 1, 128, 512>}, {transform_indices = @transform_5, window_bounds = array<i64: 1, 128, 512>}, {transform_indices = @transform_6, window_bounds = array<i64: 1, 1, 512>}, {transform_indices = @transform_7, window_bounds = array<i64: 1, 1, 512>}, {transform_indices = @transform_8, window_bounds = array<i64: 1, 1, 512>}, {transform_indices = @transform_9, window_bounds = array<i64: 1, 2, 512>}]} {
    %c0_i32 = arith.constant 0 : i32
    %0 = arith.cmpi eq, %arg1, %c0_i32 : i32
    %1 = arith.extui %0 : i1 to i32
    %c0_i32_0 = arith.constant 0 : i32
    %2 = arith.cmpi ne, %1, %c0_i32_0 : i32
    scf.if %2 {
      %c0_33 = arith.constant 0 : index
      %c0_34 = arith.constant 0 : index
      %c0_35 = arith.constant 0 : index
      %30 = vector.load %arg8[%c0_33, %c0_34, %c0_35] : memref<1x1x512xf32, #tpu.memory_space<vmem>>, vector<1x1x512xf32>
      %31 = vector.shape_cast %30 : vector<1x1x512xf32> to vector<1x512xf32>
      %32 = vector.shape_cast %31 : vector<1x512xf32> to vector<1x512xf32>
      %33 = vector.broadcast %32 : vector<1x512xf32> to vector<2x512xf32>
      %c0_36 = arith.constant 0 : index
      %c0_37 = arith.constant 0 : index
      %34 = vector.load %arg12[%c0_36, %c0_37] : memref<2x512xf32, #tpu.memory_space<vmem>>, vector<2x512xf32>
      tpu.vector_store %arg12[%c0_36, %c0_37], %33 {strides = array<i32>} : memref<2x512xf32, #tpu.memory_space<vmem>>, vector<2x512xf32>,
      %c0_38 = arith.constant 0 : index
      %c0_39 = arith.constant 0 : index
      %c0_40 = arith.constant 0 : index
      %35 = vector.load %arg9[%c0_38, %c0_39, %c0_40] : memref<1x1x512xf32, #tpu.memory_space<vmem>>, vector<1x1x512xf32>
      %36 = vector.shape_cast %35 : vector<1x1x512xf32> to vector<1x512xf32>
      %37 = vector.shape_cast %36 : vector<1x512xf32> to vector<1x512xf32>
      %38 = vector.broadcast %37 : vector<1x512xf32> to vector<2x512xf32>
      %c0_41 = arith.constant 0 : index
      %c0_42 = arith.constant 0 : index
      %39 = vector.load %arg13[%c0_41, %c0_42] : memref<2x512xf32, #tpu.memory_space<vmem>>, vector<2x512xf32>
      tpu.vector_store %arg13[%c0_41, %c0_42], %38 {strides = array<i32>} : memref<2x512xf32, #tpu.memory_space<vmem>>, vector<2x512xf32>,
      %c0_43 = arith.constant 0 : index
      %c0_44 = arith.constant 0 : index
      %c0_45 = arith.constant 0 : index
      %40 = vector.load %arg10[%c0_43, %c0_44, %c0_45] : memref<1x1x512xf32, #tpu.memory_space<vmem>>, vector<1x1x512xf32>
      %41 = vector.shape_cast %40 : vector<1x1x512xf32> to vector<1x512xf32>
      %42 = vector.shape_cast %41 : vector<1x512xf32> to vector<1x512xf32>
      %43 = vector.broadcast %42 : vector<1x512xf32> to vector<2x512xf32>
      %c0_46 = arith.constant 0 : index
      %c0_47 = arith.constant 0 : index
      %44 = vector.load %arg14[%c0_46, %c0_47] : memref<2x512xf32, #tpu.memory_space<vmem>>, vector<2x512xf32>
      tpu.vector_store %arg14[%c0_46, %c0_47], %43 {strides = array<i32>} : memref<2x512xf32, #tpu.memory_space<vmem>>, vector<2x512xf32>,
    } else {
    }
    %c0 = arith.constant 0 : index
    %c0_1 = arith.constant 0 : index
    %3 = vector.load %arg12[%c0, %c0_1] : memref<2x512xf32, #tpu.memory_space<vmem>>, vector<2x512xf32>
    %c0_2 = arith.constant 0 : index
    %c0_3 = arith.constant 0 : index
    %c0_4 = arith.constant 0 : index
    %4 = vector.load %arg2[%c0_2, %c0_3, %c0_4] : memref<1x2x128xf32, #tpu.memory_space<vmem>>, vector<1x2x128xf32>
    %5 = vector.shape_cast %4 : vector<1x2x128xf32> to vector<2x128xf32>
    %c0_5 = arith.constant 0 : index
    %c0_6 = arith.constant 0 : index
    %c0_7 = arith.constant 0 : index
    %6 = vector.load %arg5[%c0_5, %c0_6, %c0_7] : memref<1x128x512xf32, #tpu.memory_space<vmem>>, vector<1x128x512xf32>
    %7 = vector.shape_cast %6 : vector<1x128x512xf32> to vector<128x512xf32>
    %cst = arith.constant dense<0.000000e+00> : vector<2x512xf32>
    %8 = tpu.matmul %5, %7, %cst {dimension_numbers = #tpu.dot_dimension_numbers<[1], [0], [0], [1], [0, 0, 1, 1], [], []>} : vector<2x128xf32>, vector<128x512xf32>, vector<2x512xf32> -> vector<2x512xf32>
    %9 = arith.addf %3, %8 : vector<2x512xf32>
    %c0_8 = arith.constant 0 : index
    %c0_9 = arith.constant 0 : index
    %10 = vector.load %arg12[%c0_8, %c0_9] : memref<2x512xf32, #tpu.memory_space<vmem>>, vector<2x512xf32>
    tpu.vector_store %arg12[%c0_8, %c0_9], %9 {strides = array<i32>} : memref<2x512xf32, #tpu.memory_space<vmem>>, vector<2x512xf32>,
    %c0_10 = arith.constant 0 : index
    %c0_11 = arith.constant 0 : index
    %11 = vector.load %arg13[%c0_10, %c0_11] : memref<2x512xf32, #tpu.memory_space<vmem>>, vector<2x512xf32>
    %c0_12 = arith.constant 0 : index
    %c0_13 = arith.constant 0 : index
    %c0_14 = arith.constant 0 : index
    %12 = vector.load %arg3[%c0_12, %c0_13, %c0_14] : memref<1x2x128xf32, #tpu.memory_space<vmem>>, vector<1x2x128xf32>
    %13 = vector.shape_cast %12 : vector<1x2x128xf32> to vector<2x128xf32>
    %c0_15 = arith.constant 0 : index
    %c0_16 = arith.constant 0 : index
    %c0_17 = arith.constant 0 : index
    %14 = vector.load %arg6[%c0_15, %c0_16, %c0_17] : memref<1x128x512xf32, #tpu.memory_space<vmem>>, vector<1x128x512xf32>
    %15 = vector.shape_cast %14 : vector<1x128x512xf32> to vector<128x512xf32>
    %cst_18 = arith.constant dense<0.000000e+00> : vector<2x512xf32>
    %16 = tpu.matmul %13, %15, %cst_18 {dimension_numbers = #tpu.dot_dimension_numbers<[1], [0], [0], [1], [0, 0, 1, 1], [], []>} : vector<2x128xf32>, vector<128x512xf32>, vector<2x512xf32> -> vector<2x512xf32>
    %17 = arith.addf %11, %16 : vector<2x512xf32>
    %c0_19 = arith.constant 0 : index
    %c0_20 = arith.constant 0 : index
    %18 = vector.load %arg13[%c0_19, %c0_20] : memref<2x512xf32, #tpu.memory_space<vmem>>, vector<2x512xf32>
    tpu.vector_store %arg13[%c0_19, %c0_20], %17 {strides = array<i32>} : memref<2x512xf32, #tpu.memory_space<vmem>>, vector<2x512xf32>,
    %c0_21 = arith.constant 0 : index
    %c0_22 = arith.constant 0 : index
    %19 = vector.load %arg14[%c0_21, %c0_22] : memref<2x512xf32, #tpu.memory_space<vmem>>, vector<2x512xf32>
    %c0_23 = arith.constant 0 : index
    %c0_24 = arith.constant 0 : index
    %c0_25 = arith.constant 0 : index
    %20 = vector.load %arg4[%c0_23, %c0_24, %c0_25] : memref<1x2x128xf32, #tpu.memory_space<vmem>>, vector<1x2x128xf32>
    %21 = vector.shape_cast %20 : vector<1x2x128xf32> to vector<2x128xf32>
    %c0_26 = arith.constant 0 : index
    %c0_27 = arith.constant 0 : index
    %c0_28 = arith.constant 0 : index
    %22 = vector.load %arg7[%c0_26, %c0_27, %c0_28] : memref<1x128x512xf32, #tpu.memory_space<vmem>>, vector<1x128x512xf32>
    %23 = vector.shape_cast %22 : vector<1x128x512xf32> to vector<128x512xf32>
    %cst_29 = arith.constant dense<0.000000e+00> : vector<2x512xf32>
    %24 = tpu.matmul %21, %23, %cst_29 {dimension_numbers = #tpu.dot_dimension_numbers<[1], [0], [0], [1], [0, 0, 1, 1], [], []>} : vector<2x128xf32>, vector<128x512xf32>, vector<2x512xf32> -> vector<2x512xf32>
    %25 = arith.addf %19, %24 : vector<2x512xf32>
    %c0_30 = arith.constant 0 : index
    %c0_31 = arith.constant 0 : index
    %26 = vector.load %arg14[%c0_30, %c0_31] : memref<2x512xf32, #tpu.memory_space<vmem>>, vector<2x512xf32>
    tpu.vector_store %arg14[%c0_30, %c0_31], %25 {strides = array<i32>} : memref<2x512xf32, #tpu.memory_space<vmem>>, vector<2x512xf32>,
    %c3_i32 = arith.constant 3 : i32
    %27 = arith.cmpi eq, %arg1, %c3_i32 : i32
    %28 = arith.extui %27 : i1 to i32
    %c0_i32_32 = arith.constant 0 : i32
    %29 = arith.cmpi ne, %28, %c0_i32_32 : i32
    scf.if %29 {
      %c0_33 = arith.constant 0 : index
      %c0_34 = arith.constant 0 : index
      %30 = vector.load %arg12[%c0_33, %c0_34] : memref<2x512xf32, #tpu.memory_space<vmem>>, vector<2x512xf32>
      %c0_35 = arith.constant 0 : index
      %c0_36 = arith.constant 0 : index
      %31 = vector.load %arg13[%c0_35, %c0_36] : memref<2x512xf32, #tpu.memory_space<vmem>>, vector<2x512xf32>
      %c0_37 = arith.constant 0 : index
      %c0_38 = arith.constant 0 : index
      %32 = vector.load %arg14[%c0_37, %c0_38] : memref<2x512xf32, #tpu.memory_space<vmem>>, vector<2x512xf32>
      %cst_39 = arith.constant 5.120000e+02 : f32
      %cst_40 = arith.constant 5.000000e-01 : f32
      %33 = math.powf %cst_39, %cst_40 : f32
      %cst_41 = arith.constant dense<0.000000e+00> : vector<2x2xf32>
      %34 = tpu.matmul %30, %31, %cst_41 {dimension_numbers = #tpu.dot_dimension_numbers<[1], [1], [0], [0], [0, 0, 1, 0], [], []>} : vector<2x512xf32>, vector<2x512xf32>, vector<2x2xf32> -> vector<2x2xf32>
      %35 = vector.broadcast %33 : f32 to vector<2x2xf32>
      %36 = arith.mulf %34, %35 : vector<2x2xf32>
      %cst_42 = arith.constant dense<0xFF800000> : vector<2xf32>
      %37 = vector.multi_reduction <maximumf>, %36, %cst_42 [1] : vector<2x2xf32> to vector<2xf32>
      %38 = vector.shape_cast %37 : vector<2xf32> to vector<2x1xf32>
      %39 = vector.broadcast %38 : vector<2x1xf32> to vector<2x2xf32>
      %40 = arith.subf %36, %39 : vector<2x2xf32>
      %41 = math.exp %40 : vector<2x2xf32>
      %cst_43 = arith.constant dense<0.000000e+00> : vector<2xf32>
      %42 = vector.multi_reduction <add>, %41, %cst_43 [1] : vector<2x2xf32> to vector<2xf32>
      %43 = vector.shape_cast %42 : vector<2xf32> to vector<2x1xf32>
      %44 = tpu.reciprocal %43 {approx = true} : vector<2x1xf32> -> vector<2x1xf32>
      %45 = vector.broadcast %44 : vector<2x1xf32> to vector<2x2xf32>
      %46 = arith.mulf %41, %45 : vector<2x2xf32>
      %cst_44 = arith.constant dense<0.000000e+00> : vector<2x512xf32>
      %47 = tpu.matmul %46, %32, %cst_44 {dimension_numbers = #tpu.dot_dimension_numbers<[1], [0], [0], [1], [0, 0, 1, 1], [], []>} : vector<2x2xf32>, vector<2x512xf32>, vector<2x512xf32> -> vector<2x512xf32>
      %c0_45 = arith.constant 0 : index
      %c0_46 = arith.constant 0 : index
      %c0_47 = arith.constant 0 : index
      %48 = vector.load %arg11[%c0_45, %c0_46, %c0_47] : memref<1x2x512xf32, #tpu.memory_space<vmem>>, vector<1x2x512xf32>
      %49 = vector.shape_cast %48 : vector<1x2x512xf32> to vector<2x512xf32>
      %50 = vector.shape_cast %47 : vector<2x512xf32> to vector<1x2x512xf32>
      tpu.vector_store %arg11[%c0_45, %c0_46, %c0_47], %50 {strides = array<i32>} : memref<1x2x512xf32, #tpu.memory_space<vmem>>, vector<1x2x512xf32>,
    } else {
    }
    return
  }
  func.func @transform_0(%arg0: i32, %arg1: i32) -> (i32, i32, i32) {
    %c0_i32 = arith.constant 0 : i32
    %c0_i32_0 = arith.constant 0 : i32
    return %arg0, %c0_i32, %arg1 : i32, i32, i32
  }
  func.func @transform_1(%arg0: i32, %arg1: i32) -> (i32, i32, i32) {
    %c0_i32 = arith.constant 0 : i32
    %c0_i32_0 = arith.constant 0 : i32
    return %arg0, %c0_i32, %arg1 : i32, i32, i32
  }
  func.func @transform_2(%arg0: i32, %arg1: i32) -> (i32, i32, i32) {
    %c0_i32 = arith.constant 0 : i32
    %c0_i32_0 = arith.constant 0 : i32
    return %arg0, %c0_i32, %arg1 : i32, i32, i32
  }
  func.func @transform_3(%arg0: i32, %arg1: i32) -> (i32, i32, i32) {
    %c0_i32 = arith.constant 0 : i32
    %c0_i32_0 = arith.constant 0 : i32
    return %arg0, %arg1, %c0_i32 : i32, i32, i32
  }
  func.func @transform_4(%arg0: i32, %arg1: i32) -> (i32, i32, i32) {
    %c0_i32 = arith.constant 0 : i32
    %c0_i32_0 = arith.constant 0 : i32
    return %arg0, %arg1, %c0_i32 : i32, i32, i32
  }
  func.func @transform_5(%arg0: i32, %arg1: i32) -> (i32, i32, i32) {
    %c0_i32 = arith.constant 0 : i32
    %c0_i32_0 = arith.constant 0 : i32
    return %arg0, %arg1, %c0_i32 : i32, i32, i32
  }
  func.func @transform_6(%arg0: i32, %arg1: i32) -> (i32, i32, i32) {
    %c0_i32 = arith.constant 0 : i32
    %c0_i32_0 = arith.constant 0 : i32
    %c0_i32_1 = arith.constant 0 : i32
    return %arg0, %c0_i32, %c0_i32_0 : i32, i32, i32
  }
  func.func @transform_7(%arg0: i32, %arg1: i32) -> (i32, i32, i32) {
    %c0_i32 = arith.constant 0 : i32
    %c0_i32_0 = arith.constant 0 : i32
    %c0_i32_1 = arith.constant 0 : i32
    return %arg0, %c0_i32, %c0_i32_0 : i32, i32, i32
  }
  func.func @transform_8(%arg0: i32, %arg1: i32) -> (i32, i32, i32) {
    %c0_i32 = arith.constant 0 : i32
    %c0_i32_0 = arith.constant 0 : i32
    %c0_i32_1 = arith.constant 0 : i32
    return %arg0, %c0_i32, %c0_i32_0 : i32, i32, i32
  }
  func.func @transform_9(%arg0: i32, %arg1: i32) -> (i32, i32, i32) {
    %c0_i32 = arith.constant 0 : i32
    %c0_i32_0 = arith.constant 0 : i32
    %c0_i32_1 = arith.constant 0 : i32
    return %arg0, %c0_i32, %c0_i32_0 : i32, i32, i32
  }
}

</mosaic_0001>

<llo_original>
// kernel: tpu_custom_call.1
$region0: #{tpu_custom_call.1}
  #allocation0 [shape = 'u32[]', space=smem, size = 0x4, offset = 0x4, fixed_abs, tag = 'smem constant byte address 0x4 - core index']
  #allocation1 [shape = 'u32[144,128]{1,0:T(1,128)}', space=vmem, size = 0x12000, scoped, tag = 'internal scratch']
  #allocation2 [shape = 'f32[2,512]{1,0:T(2,128)}', space=vmem, size = 0x1000, scoped, tag = 'scratch operand']
  #allocation3 [shape = 'f32[2,512]{1,0:T(2,128)}', space=vmem, size = 0x1000, scoped, tag = 'scratch operand']
  #allocation4 [shape = 'f32[2,512]{1,0:T(2,128)}', space=vmem, size = 0x1000, scoped, tag = 'scratch operand']
  %s0 = inlined_call_operand.hbm [shape: f32[2,2,512], index: 0, kind: input, shape index: {}]
  %s1 = inlined_call_operand.hbm [shape: f32[2,2,512], index: 1, kind: input, shape index: {}]
  %s2 = inlined_call_operand.hbm [shape: f32[2,2,512], index: 2, kind: input, shape index: {}]
  %s3 = inlined_call_operand.hbm [shape: f32[2,512,512], index: 3, kind: input, shape index: {}]
  %s4 = inlined_call_operand.hbm [shape: f32[2,512,512], index: 4, kind: input, shape index: {}]
  %s5 = inlined_call_operand.hbm [shape: f32[2,512,512], index: 5, kind: input, shape index: {}]
  %s6 = inlined_call_operand.hbm [shape: f32[2,1,512], index: 6, kind: input, shape index: {}]
  %s7 = inlined_call_operand.hbm [shape: f32[2,1,512], index: 7, kind: input, shape index: {}]
  %s8 = inlined_call_operand.hbm [shape: f32[2,1,512], index: 8, kind: input, shape index: {}]
  %s9 = inlined_call_operand.hbm [shape: f32[2,2,512], index: 9, kind: output, shape index: {}]
  %s10 = sld [smem:[#allocation0]]
  $region113: #{tpu_custom_call.1} parent=0
    _
  %s12 = ssub.s32 1, %s10
  %s13 = scalar_select 0, %s12, %s10
  $region1: #{tpu_custom_call.1} parent=0
    #allocation5 [shape = 'u8[2048]{0}', space=vmem, size = 0x800, scoped, tag = 'input window, operand 0']
    #allocation6 [shape = 's32[2]{0}', space=sflag, size = 0x8, scoped, tag = 'scoped memory for tpu_custom_call.1']
    #allocation7 [shape = 's32[2]{0}', space=sflag, size = 0x8, scoped, tag = 'scoped memory for tpu_custom_call.1']
    #allocation8 [shape = 'u8[2048]{0}', space=vmem, size = 0x800, scoped, tag = 'input window, operand 1']
    #allocation9 [shape = 's32[2]{0}', space=sflag, size = 0x8, scoped, tag = 'scoped memory for tpu_custom_call.1']
    #allocation10 [shape = 'u8[2048]{0}', space=vmem, size = 0x800, scoped, tag = 'input window, operand 2']
    #allocation11 [shape = 'u8[524288]{0}', space=vmem, size = 0x80000, scoped, tag = 'input window, operand 3']
    #allocation12 [shape = 's32[2]{0}', space=sflag, size = 0x8, scoped, tag = 'scoped memory for tpu_custom_call.1']
    #allocation13 [shape = 'u8[524288]{0}', space=vmem, size = 0x80000, scoped, tag = 'input window, operand 4']
    #allocation14 [shape = 'u8[524288]{0}', space=vmem, size = 0x80000, scoped, tag = 'input window, operand 5']
    #allocation15 [shape = 's32[2]{0}', space=sflag, size = 0x8, scoped, tag = 'scoped memory for tpu_custom_call.1']
    #allocation16 [shape = 'u8[4096]{0}', space=vmem, size = 0x1000, scoped, tag = 'input window, operand 6']
    #allocation17 [shape = 'u8[4096]{0}', space=vmem, size = 0x1000, scoped, tag = 'input window, operand 7']
    #allocation18 [shape = 's32[2]{0}', space=sflag, size = 0x8, scoped, tag = 'scoped memory for tpu_custom_call.1']
    #allocation19 [shape = 'u8[4096]{0}', space=vmem, size = 0x1000, scoped, tag = 'input window, operand 8']
    #allocation20 [shape = 'u8[8192]{0}', space=vmem, size = 0x2000, scoped, tag = 'output window, operand 0']
    %14 = vsyncpa [#allocation6], 0
    %s15 = scalar_lea.sflag [#allocation6], 1
    %16 = vsyncpa %s15, 0
    %17 = vsyncpa [#allocation9], 0
    %s18 = scalar_lea.sflag [#allocation9], 1
    %19 = vsyncpa %s18, 0
    %20 = vsyncpa [#allocation12], 0
    %s21 = scalar_lea.sflag [#allocation12], 1
    %22 = vsyncpa %s21, 0
    %23 = vsyncpa [#allocation15], 0
    %s24 = scalar_lea.sflag [#allocation15], 1
    %25 = vsyncpa %s24, 0
    %26 = vsyncpa [#allocation18], 0
    %s27 = scalar_lea.sflag [#allocation18], 1
    %28 = vsyncpa %s27, 0
    %29 = vsyncpa [#allocation7], 0
    %s30 = scalar_lea.sflag [#allocation7], 1
    %31 = vsyncpa %s30, 0
    loop: start=0, step=1, limit=10
    $region2: #{tpu_custom_call.1} parent=1 // loop_pre_header
      _
    $region3: #{tpu_custom_call.1} parent=1 // loop_header
      %s33 = sphi 0, %s37
      %p34 = scmp.ge.s32.totalorder %s33, 10
      %s40 = sphi 0, %s52
      %s41 = sphi 0, %s48
      %s42 = sphi 0, %s40
      %s43 = sphi 0, %s41
      %s44 = sphi 0, %s42
      %s45 = sphi 0, %s43
      %s57 = sphi 0, %s59
      %s60 = sphi 0, %s57
      %s61 = sphi 0, %s60
      %s77 = sphi 0, %s61
      %s85 = sphi 0, %s87
      %s88 = sphi 0, %s85
      %s89 = sphi 0, %s88
      %s105 = sphi 0, %s89
      %s113 = sphi 0, %s115
      %s116 = sphi 0, %s113
      %s117 = sphi 0, %s116
      %s133 = sphi 0, %s117
      %s141 = sphi 0, %s143
      %s144 = sphi 0, %s141
      %s145 = sphi 0, %s144
      %s161 = sphi 0, %s145
      %s169 = sphi 0, %s171
      %s172 = sphi 0, %s169
      %s173 = sphi 0, %s172
      %s189 = sphi 0, %s173
      %s197 = sphi 0, %s199
      %s200 = sphi 0, %s197
      %s201 = sphi 0, %s200
      %s217 = sphi 0, %s201
      %s223 = sphi 0, %s225
      %s226 = sphi 0, %s223
      %s227 = sphi 0, %s226
      %s243 = sphi 0, %s227
      %s249 = sphi 0, %s251
      %s252 = sphi 0, %s249
      %s253 = sphi 0, %s252
      %s269 = sphi 0, %s253
      %s275 = sphi 0, %s277
      %s278 = sphi 0, %s275
      %s279 = sphi 0, %s278
      %s295 = sphi 0, %s279
      %s301 = sphi 0, %s303
      %s304 = sphi 0, %s301
      %s305 = sphi 0, %s304
      %s321 = sphi 0, %s305
    $region4: #{tpu_custom_call.1} parent=1 // loop_header_branch
      %36 = sbr.rel (%p34) target = $region8
    $region5: #{tpu_custom_call.1} parent=1 // loop_body
      %s38 = ssub.s32 %s33, 1
      %s39 = ssub.s32 %s33, 2
      %s46 = sadd.s32 1, %s41
      %p47 = scmp.ge.s32.totalorder %s46, 4
      %s48 = scalar_select %p47, 0, %s46
      %s49 = sadd.s32 1, %s40
      %s50 = scalar_select %p47, %s49, %s40
      %p51 = scmp.ge.s32.totalorder %s50, 2
      %s52 = scalar_select %p51, 0, %s50
      %s53 = ssub.s32 %s40, %s52
      %s54 = ssub.s32 %s41, %s48
      %s55 = sor.u32 %s53, %s54
      %p56 = scmp.eq.s32.totalorder %s55, 0
      %s58 = sadd.s32 %s57, 1
      %s59 = scalar_select %p56, %s57, %s58
      %p62 = pneg %p56
      %p63 = scmp.eq.s32.totalorder %s33, 7
      %p64 = por %p62, %p63
      %p65 = scmp.ne.s32.totalorder %s57, %s60
      %p66 = scmp.eq.s32.totalorder %s33, 0
      %p67 = por %p65, %p66
      %p68 = scmp.ne.s32.totalorder %s57, %s60
      %p69 = scmp.eq.s32.totalorder %s38, 7
      %p70 = por %p68, %p69
      %p71 = scmp.ne.s32.totalorder %s60, %s61
      %p72 = scmp.eq.s32.totalorder %s38, 0
      %p73 = por %p71, %p72
      %p74 = scmp.ne.s32.totalorder %s60, %s61
      %p75 = scmp.eq.s32.totalorder %s39, 7
      %p76 = por %p74, %p75
      %p78 = scmp.ne.s32.totalorder %s61, %s77
      %p79 = scmp.eq.s32.totalorder %s39, 0
      %p80 = por %p78, %p79
      %s81 = ssub.s32 %s40, %s52
      %s82 = ssub.s32 %s41, %s48
      %s83 = sor.u32 %s81, %s82
      %p84 = scmp.eq.s32.totalorder %s83, 0
      %s86 = sadd.s32 %s85, 1
      %s87 = scalar_select %p84, %s85, %s86
      %p90 = pneg %p84
      %p91 = scmp.eq.s32.totalorder %s33, 7
      %p92 = por %p90, %p91
      %p93 = scmp.ne.s32.totalorder %s85, %s88
      %p94 = scmp.eq.s32.totalorder %s33, 0
      %p95 = por %p93, %p94
      %p96 = scmp.ne.s32.totalorder %s85, %s88
      %p97 = scmp.eq.s32.totalorder %s38, 7
      %p98 = por %p96, %p97
      %p99 = scmp.ne.s32.totalorder %s88, %s89
      %p100 = scmp.eq.s32.totalorder %s38, 0
      %p101 = por %p99, %p100
      %p102 = scmp.ne.s32.totalorder %s88, %s89
      %p103 = scmp.eq.s32.totalorder %s39, 7
      %p104 = por %p102, %p103
      %p106 = scmp.ne.s32.totalorder %s89, %s105
      %p107 = scmp.eq.s32.totalorder %s39, 0
      %p108 = por %p106, %p107
      %s109 = ssub.s32 %s40, %s52
      %s110 = ssub.s32 %s41, %s48
      %s111 = sor.u32 %s109, %s110
      %p112 = scmp.eq.s32.totalorder %s111, 0
      %s114 = sadd.s32 %s113, 1
      %s115 = scalar_select %p112, %s113, %s114
      %p118 = pneg %p112
      %p119 = scmp.eq.s32.totalorder %s33, 7
      %p120 = por %p118, %p119
      %p121 = scmp.ne.s32.totalorder %s113, %s116
      %p122 = scmp.eq.s32.totalorder %s33, 0
      %p123 = por %p121, %p122
      %p124 = scmp.ne.s32.totalorder %s113, %s116
      %p125 = scmp.eq.s32.totalorder %s38, 7
      %p126 = por %p124, %p125
      %p127 = scmp.ne.s32.totalorder %s116, %s117
      %p128 = scmp.eq.s32.totalorder %s38, 0
      %p129 = por %p127, %p128
      %p130 = scmp.ne.s32.totalorder %s116, %s117
      %p131 = scmp.eq.s32.totalorder %s39, 7
      %p132 = por %p130, %p131
      %p134 = scmp.ne.s32.totalorder %s117, %s133
      %p135 = scmp.eq.s32.totalorder %s39, 0
      %p136 = por %p134, %p135
      %s137 = ssub.s32 %s40, %s52
      %s138 = ssub.s32 %s41, %s48
      %s139 = sor.u32 %s137, %s138
      %p140 = scmp.eq.s32.totalorder %s139, 0
      %s142 = sadd.s32 %s141, 1
      %s143 = scalar_select %p140, %s141, %s142
      %p146 = pneg %p140
      %p147 = scmp.eq.s32.totalorder %s33, 7
      %p148 = por %p146, %p147
      %p149 = scmp.ne.s32.totalorder %s141, %s144
      %p150 = scmp.eq.s32.totalorder %s33, 0
      %p151 = por %p149, %p150
      %p152 = scmp.ne.s32.totalorder %s141, %s144
      %p153 = scmp.eq.s32.totalorder %s38, 7
      %p154 = por %p152, %p153
      %p155 = scmp.ne.s32.totalorder %s144, %s145
      %p156 = scmp.eq.s32.totalorder %s38, 0
      %p157 = por %p155, %p156
      %p158 = scmp.ne.s32.totalorder %s144, %s145
      %p159 = scmp.eq.s32.totalorder %s39, 7
      %p160 = por %p158, %p159
      %p162 = scmp.ne.s32.totalorder %s145, %s161
      %p163 = scmp.eq.s32.totalorder %s39, 0
      %p164 = por %p162, %p163
      %s165 = ssub.s32 %s40, %s52
      %s166 = ssub.s32 %s41, %s48
      %s167 = sor.u32 %s165, %s166
      %p168 = scmp.eq.s32.totalorder %s167, 0
      %s170 = sadd.s32 %s169, 1
      %s171 = scalar_select %p168, %s169, %s170
      %p174 = pneg %p168
      %p175 = scmp.eq.s32.totalorder %s33, 7
      %p176 = por %p174, %p175
      %p177 = scmp.ne.s32.totalorder %s169, %s172
      %p178 = scmp.eq.s32.totalorder %s33, 0
      %p179 = por %p177, %p178
      %p180 = scmp.ne.s32.totalorder %s169, %s172
      %p181 = scmp.eq.s32.totalorder %s38, 7
      %p182 = por %p180, %p181
      %p183 = scmp.ne.s32.totalorder %s172, %s173
      %p184 = scmp.eq.s32.totalorder %s38, 0
      %p185 = por %p183, %p184
      %p186 = scmp.ne.s32.totalorder %s172, %s173
      %p187 = scmp.eq.s32.totalorder %s39, 7
      %p188 = por %p186, %p187
      %p190 = scmp.ne.s32.totalorder %s173, %s189
      %p191 = scmp.eq.s32.totalorder %s39, 0
      %p192 = por %p190, %p191
      %s193 = ssub.s32 %s40, %s52
      %s194 = ssub.s32 %s41, %s48
      %s195 = sor.u32 %s193, %s194
      %p196 = scmp.eq.s32.totalorder %s195, 0
      %s198 = sadd.s32 %s197, 1
      %s199 = scalar_select %p196, %s197, %s198
      %p202 = pneg %p196
      %p203 = scmp.eq.s32.totalorder %s33, 7
      %p204 = por %p202, %p203
      %p205 = scmp.ne.s32.totalorder %s197, %s200
      %p206 = scmp.eq.s32.totalorder %s33, 0
      %p207 = por %p205, %p206
      %p208 = scmp.ne.s32.totalorder %s197, %s200
      %p209 = scmp.eq.s32.totalorder %s38, 7
      %p210 = por %p208, %p209
      %p211 = scmp.ne.s32.totalorder %s200, %s201
      %p212 = scmp.eq.s32.totalorder %s38, 0
      %p213 = por %p211, %p212
      %p214 = scmp.ne.s32.totalorder %s200, %s201
      %p215 = scmp.eq.s32.totalorder %s39, 7
      %p216 = por %p214, %p215
      %p218 = scmp.ne.s32.totalorder %s201, %s217
      %p219 = scmp.eq.s32.totalorder %s39, 0
      %p220 = por %p218, %p219
      %s221 = ssub.s32 %s40, %s52
      %p222 = scmp.eq.s32.totalorder %s221, 0
      %s224 = sadd.s32 %s223, 1
      %s225 = scalar_select %p222, %s223, %s224
      %p228 = pneg %p222
      %p229 = scmp.eq.s32.totalorder %s33, 7
      %p230 = por %p228, %p229
      %p231 = scmp.ne.s32.totalorder %s223, %s226
      %p232 = scmp.eq.s32.totalorder %s33, 0
      %p233 = por %p231, %p232
      %p234 = scmp.ne.s32.totalorder %s223, %s226
      %p235 = scmp.eq.s32.totalorder %s38, 7
      %p236 = por %p234, %p235
      %p237 = scmp.ne.s32.totalorder %s226, %s227
      %p238 = scmp.eq.s32.totalorder %s38, 0
      %p239 = por %p237, %p238
      %p240 = scmp.ne.s32.totalorder %s226, %s227
      %p241 = scmp.eq.s32.totalorder %s39, 7
      %p242 = por %p240, %p241
      %p244 = scmp.ne.s32.totalorder %s227, %s243
      %p245 = scmp.eq.s32.totalorder %s39, 0
      %p246 = por %p244, %p245
      %s247 = ssub.s32 %s40, %s52
      %p248 = scmp.eq.s32.totalorder %s247, 0
      %s250 = sadd.s32 %s249, 1
      %s251 = scalar_select %p248, %s249, %s250
      %p254 = pneg %p248
      %p255 = scmp.eq.s32.totalorder %s33, 7
      %p256 = por %p254, %p255
      %p257 = scmp.ne.s32.totalorder %s249, %s252
      %p258 = scmp.eq.s32.totalorder %s33, 0
      %p259 = por %p257, %p258
      %p260 = scmp.ne.s32.totalorder %s249, %s252
      %p261 = scmp.eq.s32.totalorder %s38, 7
      %p262 = por %p260, %p261
      %p263 = scmp.ne.s32.totalorder %s252, %s253
      %p264 = scmp.eq.s32.totalorder %s38, 0
      %p265 = por %p263, %p264
      %p266 = scmp.ne.s32.totalorder %s252, %s253
      %p267 = scmp.eq.s32.totalorder %s39, 7
      %p268 = por %p266, %p267
      %p270 = scmp.ne.s32.totalorder %s253, %s269
      %p271 = scmp.eq.s32.totalorder %s39, 0
      %p272 = por %p270, %p271
      %s273 = ssub.s32 %s40, %s52
      %p274 = scmp.eq.s32.totalorder %s273, 0
      %s276 = sadd.s32 %s275, 1
      %s277 = scalar_select %p274, %s275, %s276
      %p280 = pneg %p274
      %p281 = scmp.eq.s32.totalorder %s33, 7
      %p282 = por %p280, %p281
      %p283 = scmp.ne.s32.totalorder %s275, %s278
      %p284 = scmp.eq.s32.totalorder %s33, 0
      %p285 = por %p283, %p284
      %p286 = scmp.ne.s32.totalorder %s275, %s278
      %p287 = scmp.eq.s32.totalorder %s38, 7
      %p288 = por %p286, %p287
      %p289 = scmp.ne.s32.totalorder %s278, %s279
      %p290 = scmp.eq.s32.totalorder %s38, 0
      %p291 = por %p289, %p290
      %p292 = scmp.ne.s32.totalorder %s278, %s279
      %p293 = scmp.eq.s32.totalorder %s39, 7
      %p294 = por %p292, %p293
      %p296 = scmp.ne.s32.totalorder %s279, %s295
      %p297 = scmp.eq.s32.totalorder %s39, 0
      %p298 = por %p296, %p297
      %s299 = ssub.s32 %s40, %s52
      %p300 = scmp.eq.s32.totalorder %s299, 0
      %s302 = sadd.s32 %s301, 1
      %s303 = scalar_select %p300, %s301, %s302
      %p306 = pneg %p300
      %p307 = scmp.eq.s32.totalorder %s33, 7
      %p308 = por %p306, %p307
      %p309 = scmp.ne.s32.totalorder %s301, %s304
      %p310 = scmp.eq.s32.totalorder %s33, 0
      %p311 = por %p309, %p310
      %p312 = scmp.ne.s32.totalorder %s301, %s304
      %p313 = scmp.eq.s32.totalorder %s38, 7
      %p314 = por %p312, %p313
      %p315 = scmp.ne.s32.totalorder %s304, %s305
      %p316 = scmp.eq.s32.totalorder %s38, 0
      %p317 = por %p315, %p316
      %p318 = scmp.ne.s32.totalorder %s304, %s305
      %p319 = scmp.eq.s32.totalorder %s39, 7
      %p320 = por %p318, %p319
      %p322 = scmp.ne.s32.totalorder %s305, %s321
      %p323 = scmp.eq.s32.totalorder %s39, 0
      %p324 = por %p322, %p323
      %p325 = scmp.le.s32.totalorder 1, %s33
      %p326 = scmp.lt.s32.totalorder %s33, 9
      %p327 = pnand %p325, %p326
      %p328 = pneg %p327
      // Predicated region
      $region9: #{tpu_custom_call.1} parent=5 // pred_check
        _
      $region10: #{tpu_custom_call.1} parent=5 // pred_check_branch
        %330 = sbr.rel (%p327) target = $region12
      $region11: #{tpu_custom_call.1} parent=5 // pred_region
        %s331 = ssub.s32 %s33, 1
      $region12: #{tpu_custom_call.1} parent=5 // pred_fallthru
        _
      %p332 = scmp.lt.s32.totalorder %s33, 8
      // Predicated region
      $region13: #{tpu_custom_call.1} parent=5 // pred_check
        %p333 = pneg %p332
      $region14: #{tpu_custom_call.1} parent=5 // pred_check_branch
        %335 = sbr.rel (%p333) target = $region16
      $region15: #{tpu_custom_call.1} parent=5 // pred_region
        // Predicated region
        $region17: #{tpu_custom_call.1} parent=15 // pred_check
          %p336 = pneg %p67
        $region18: #{tpu_custom_call.1} parent=15 // pred_check_branch
          %338 = sbr.rel (%p336) target = $region20
        $region19: #{tpu_custom_call.1} parent=15 // pred_region
          %s339 = sand.u32 %s57, 1
          %s340 = scalar_lea.sflag [#allocation6], %s339
          %s341 = sand.u32 %s57, 1
          %s342 = smul.addr %s341, 2
          %s343 = scalar_lea.vmem [#allocation5], %s342
          %s345 = ssub.s32 32, 32
          %346 = vsyncadd %s340, %s345
          %s347 = smul.addr %s40, 4
          %s348 = sadd.s32 %s41, %s347
          %s349 = smul.addr %s348, 32
          %s350 = scalar_lea.hbm %s0, %s349
          %s352 = sshll.u32 %s343, 4
          %s353 = int_to_ptr.vmem [resolvable:$true] %s352
          %355 = dma.hbm_to_vmem [thread:$0]  %s350, 32, %s353, %s340
        $region20: #{tpu_custom_call.1} parent=15 // pred_fallthru
          _
        // Predicated region
        $region21: #{tpu_custom_call.1} parent=15 // pred_check
          %p356 = pneg %p95
        $region22: #{tpu_custom_call.1} parent=15 // pred_check_branch
          %358 = sbr.rel (%p356) target = $region24
        $region23: #{tpu_custom_call.1} parent=15 // pred_region
          %s359 = sand.u32 %s33, 1
          %s360 = scalar_lea.sflag [#allocation9], %s359
          %s361 = sand.u32 %s85, 1
          %s362 = smul.addr %s361, 2
          %s363 = scalar_lea.vmem [#allocation8], %s362
          %s365 = ssub.s32 32, 32
          %366 = vsyncadd %s360, %s365
          %s367 = smul.addr %s40, 4
          %s368 = sadd.s32 %s41, %s367
          %s369 = smul.addr %s368, 32
          %s370 = scalar_lea.hbm %s1, %s369
          %s372 = sshll.u32 %s363, 4
          %s373 = int_to_ptr.vmem [resolvable:$true] %s372
          %375 = dma.hbm_to_vmem [thread:$0]  %s370, 32, %s373, %s360
        $region24: #{tpu_custom_call.1} parent=15 // pred_fallthru
          _
        // Predicated region
        $region25: #{tpu_custom_call.1} parent=15 // pred_check
          %p376 = pneg %p123
        $region26: #{tpu_custom_call.1} parent=15 // pred_check_branch
          %378 = sbr.rel (%p376) target = $region28
        $region27: #{tpu_custom_call.1} parent=15 // pred_region
          %s379 = sand.u32 %s33, 1
          %s380 = scalar_lea.sflag [#allocation9], %s379
          %s381 = sand.u32 %s113, 1
          %s382 = smul.addr %s381, 2
          %s383 = scalar_lea.vmem [#allocation10], %s382
          %s385 = ssub.s32 32, 32
          %386 = vsyncadd %s380, %s385
          %s387 = smul.addr %s40, 4
          %s388 = sadd.s32 %s41, %s387
          %s389 = smul.addr %s388, 32
          %s390 = scalar_lea.hbm %s2, %s389
          %s392 = sshll.u32 %s383, 4
          %s393 = int_to_ptr.vmem [resolvable:$true] %s392
          %395 = dma.hbm_to_vmem [thread:$0]  %s390, 32, %s393, %s380
        $region28: #{tpu_custom_call.1} parent=15 // pred_fallthru
          _
        // Predicated region
        $region29: #{tpu_custom_call.1} parent=15 // pred_check
          %p396 = pneg %p151
        $region30: #{tpu_custom_call.1} parent=15 // pred_check_branch
          %398 = sbr.rel (%p396) target = $region32
        $region31: #{tpu_custom_call.1} parent=15 // pred_region
          %s399 = sand.u32 %s33, 1
          %s400 = scalar_lea.sflag [#allocation12], %s399
          %s401 = sand.u32 %s141, 1
          %s402 = smul.addr %s401, 512
          %s403 = scalar_lea.vmem [#allocation11], %s402
          %s404 = smul.u32 16, %s41
          %s406 = ssub.s32 8192, 8192
          %407 = vsyncadd %s400, %s406
          %s408 = smul.addr %s404, 4
          %s409 = smul.addr %s40, 256
          %s410 = sadd.s32 %s408, %s409
          %s411 = smul.addr %s410, 128
          %s412 = scalar_lea.hbm %s3, %s411
          %s413 = sshll.u32 %s403, 4
          %s414 = int_to_ptr.vmem [resolvable:$true] %s413
          %419 = dma.hbm_to_vmem [thread:$0]  %s412, 8192, %s414, %s400, 512, 512, 32
        $region32: #{tpu_custom_call.1} parent=15 // pred_fallthru
          _
        // Predicated region
        $region33: #{tpu_custom_call.1} parent=15 // pred_check
          %p420 = pneg %p179
        $region34: #{tpu_custom_call.1} parent=15 // pred_check_branch
          %422 = sbr.rel (%p420) target = $region36
        $region35: #{tpu_custom_call.1} parent=15 // pred_region
          %s423 = sand.u32 %s33, 1
          %s424 = scalar_lea.sflag [#allocation12], %s423
          %s425 = sand.u32 %s169, 1
          %s426 = smul.addr %s425, 512
          %s427 = scalar_lea.vmem [#allocation13], %s426
          %s428 = smul.u32 16, %s41
          %s430 = ssub.s32 8192, 8192
          %431 = vsyncadd %s424, %s430
          %s432 = smul.addr %s428, 4
          %s433 = smul.addr %s40, 256
          %s434 = sadd.s32 %s432, %s433
          %s435 = smul.addr %s434, 128
          %s436 = scalar_lea.hbm %s4, %s435
          %s437 = sshll.u32 %s427, 4
          %s438 = int_to_ptr.vmem [resolvable:$true] %s437
          %443 = dma.hbm_to_vmem [thread:$0]  %s436, 8192, %s438, %s424, 512, 512, 32
        $region36: #{tpu_custom_call.1} parent=15 // pred_fallthru
          _
        // Predicated region
        $region37: #{tpu_custom_call.1} parent=15 // pred_check
          %p444 = pneg %p207
        $region38: #{tpu_custom_call.1} parent=15 // pred_check_branch
          %446 = sbr.rel (%p444) target = $region40
        $region39: #{tpu_custom_call.1} parent=15 // pred_region
          %s447 = sand.u32 %s33, 1
          %s448 = scalar_lea.sflag [#allocation15], %s447
          %s449 = sand.u32 %s197, 1
          %s450 = smul.addr %s449, 512
          %s451 = scalar_lea.vmem [#allocation14], %s450
          %s452 = smul.u32 16, %s41
          %s454 = ssub.s32 8192, 8192
          %455 = vsyncadd %s448, %s454
          %s456 = smul.addr %s452, 4
          %s457 = smul.addr %s40, 256
          %s458 = sadd.s32 %s456, %s457
          %s459 = smul.addr %s458, 128
          %s460 = scalar_lea.hbm %s5, %s459
          %s461 = sshll.u32 %s451, 4
          %s462 = int_to_ptr.vmem [resolvable:$true] %s461
          %467 = dma.hbm_to_vmem [thread:$0]  %s460, 8192, %s462, %s448, 512, 512, 32
        $region40: #{tpu_custom_call.1} parent=15 // pred_fallthru
          _
        // Predicated region
        $region41: #{tpu_custom_call.1} parent=15 // pred_check
          %p468 = pneg %p233
        $region42: #{tpu_custom_call.1} parent=15 // pred_check_branch
          %470 = sbr.rel (%p468) target = $region44
        $region43: #{tpu_custom_call.1} parent=15 // pred_region
          %s471 = sand.u32 %s33, 1
          %s472 = scalar_lea.sflag [#allocation15], %s471
          %s473 = sand.u32 %s223, 1
          %s474 = smul.addr %s473, 4
          %s475 = scalar_lea.vmem [#allocation16], %s474
          %s477 = ssub.s32 64, 64
          %478 = vsyncadd %s472, %s477
          %s479 = smul.addr %s40, 4
          %s480 = smul.addr %s479, 16
          %s481 = scalar_lea.hbm %s6, %s480
          %s483 = sshll.u32 %s475, 4
          %s484 = int_to_ptr.vmem [resolvable:$true] %s483
          %486 = dma.hbm_to_vmem [thread:$0]  %s481, 64, %s484, %s472
        $region44: #{tpu_custom_call.1} parent=15 // pred_fallthru
          _
        // Predicated region
        $region45: #{tpu_custom_call.1} parent=15 // pred_check
          %p487 = pneg %p259
        $region46: #{tpu_custom_call.1} parent=15 // pred_check_branch
          %489 = sbr.rel (%p487) target = $region48
        $region47: #{tpu_custom_call.1} parent=15 // pred_region
          %s490 = sand.u32 %s33, 1
          %s491 = scalar_lea.sflag [#allocation18], %s490
          %s492 = sand.u32 %s249, 1
          %s493 = smul.addr %s492, 4
          %s494 = scalar_lea.vmem [#allocation17], %s493
          %s496 = ssub.s32 64, 64
          %497 = vsyncadd %s491, %s496
          %s498 = smul.addr %s40, 4
          %s499 = smul.addr %s498, 16
          %s500 = scalar_lea.hbm %s7, %s499
          %s502 = sshll.u32 %s494, 4
          %s503 = int_to_ptr.vmem [resolvable:$true] %s502
          %505 = dma.hbm_to_vmem [thread:$0]  %s500, 64, %s503, %s491
        $region48: #{tpu_custom_call.1} parent=15 // pred_fallthru
          _
        // Predicated region
        $region49: #{tpu_custom_call.1} parent=15 // pred_check
          %p506 = pneg %p285
        $region50: #{tpu_custom_call.1} parent=15 // pred_check_branch
          %508 = sbr.rel (%p506) target = $region52
        $region51: #{tpu_custom_call.1} parent=15 // pred_region
          %s509 = sand.u32 %s33, 1
          %s510 = scalar_lea.sflag [#allocation18], %s509
          %s511 = sand.u32 %s275, 1
          %s512 = smul.addr %s511, 4
          %s513 = scalar_lea.vmem [#allocation19], %s512
          %s515 = ssub.s32 64, 64
          %516 = vsyncadd %s510, %s515
          %s517 = smul.addr %s40, 4
          %s518 = smul.addr %s517, 16
          %s519 = scalar_lea.hbm %s8, %s518
          %s521 = sshll.u32 %s513, 4
          %s522 = int_to_ptr.vmem [resolvable:$true] %s521
          %524 = dma.hbm_to_vmem [thread:$0]  %s519, 64, %s522, %s510
        $region52: #{tpu_custom_call.1} parent=15 // pred_fallthru
          _
      $region16: #{tpu_custom_call.1} parent=5 // pred_fallthru
        _
      %p525 = scmp.le.s32.totalorder 1, %s33
      %p526 = scmp.lt.s32.totalorder %s33, 9
      %p527 = pnand %p525, %p526
      %p528 = pneg %p527
      // Predicated region
      $region53: #{tpu_custom_call.1} parent=5 // pred_check
        _
      $region54: #{tpu_custom_call.1} parent=5 // pred_check_branch
        %530 = sbr.rel (%p527) target = $region56
      $region55: #{tpu_custom_call.1} parent=5 // pred_region
        %s531 = ssub.s32 %s33, 1
        %s532 = sand.u32 %s60, 1
        %s533 = scalar_lea.sflag [#allocation6], %s532
        %s534 = sand.u32 %s60, 1
        %s535 = smul.addr %s534, 2
        %s536 = scalar_lea.vmem [#allocation5], %s535
        // Predicated region
        $region57: #{tpu_custom_call.1} parent=55 // pred_check
          %p537 = pneg %p73
        $region58: #{tpu_custom_call.1} parent=55 // pred_check_branch
          %539 = sbr.rel (%p537) target = $region60
        $region59: #{tpu_custom_call.1} parent=55 // pred_region
          %540 = dma.done %s533, 32
        $region60: #{tpu_custom_call.1} parent=55 // pred_fallthru
          _
        %s541 = sand.u32 %s38, 1
        %s542 = scalar_lea.sflag [#allocation9], %s541
        %s543 = sand.u32 %s88, 1
        %s544 = smul.addr %s543, 2
        %s545 = scalar_lea.vmem [#allocation8], %s544
        // Predicated region
        $region61: #{tpu_custom_call.1} parent=55 // pred_check
          %p546 = pneg %p101
        $region62: #{tpu_custom_call.1} parent=55 // pred_check_branch
          %548 = sbr.rel (%p546) target = $region64
        $region63: #{tpu_custom_call.1} parent=55 // pred_region
          %549 = dma.done %s542, 32
        $region64: #{tpu_custom_call.1} parent=55 // pred_fallthru
          _
        %s550 = sand.u32 %s38, 1
        %s551 = scalar_lea.sflag [#allocation9], %s550
        %s552 = sand.u32 %s116, 1
        %s553 = smul.addr %s552, 2
        %s554 = scalar_lea.vmem [#allocation10], %s553
        // Predicated region
        $region65: #{tpu_custom_call.1} parent=55 // pred_check
          %p555 = pneg %p129
        $region66: #{tpu_custom_call.1} parent=55 // pred_check_branch
          %557 = sbr.rel (%p555) target = $region68
        $region67: #{tpu_custom_call.1} parent=55 // pred_region
          %558 = dma.done %s551, 32
        $region68: #{tpu_custom_call.1} parent=55 // pred_fallthru
          _
        %s559 = sand.u32 %s38, 1
        %s560 = scalar_lea.sflag [#allocation12], %s559
        %s561 = sand.u32 %s144, 1
        %s562 = smul.addr %s561, 512
        %s563 = scalar_lea.vmem [#allocation11], %s562
        // Predicated region
        $region69: #{tpu_custom_call.1} parent=55 // pred_check
          %p564 = pneg %p157
        $region70: #{tpu_custom_call.1} parent=55 // pred_check_branch
          %566 = sbr.rel (%p564) target = $region72
        $region71: #{tpu_custom_call.1} parent=55 // pred_region
          %567 = dma.done %s560, 8192
        $region72: #{tpu_custom_call.1} parent=55 // pred_fallthru
          _
        %s568 = sand.u32 %s38, 1
        %s569 = scalar_lea.sflag [#allocation12], %s568
        %s570 = sand.u32 %s172, 1
        %s571 = smul.addr %s570, 512
        %s572 = scalar_lea.vmem [#allocation13], %s571
        // Predicated region
        $region73: #{tpu_custom_call.1} parent=55 // pred_check
          %p573 = pneg %p185
        $region74: #{tpu_custom_call.1} parent=55 // pred_check_branch
          %575 = sbr.rel (%p573) target = $region76
        $region75: #{tpu_custom_call.1} parent=55 // pred_region
          %576 = dma.done %s569, 8192
        $region76: #{tpu_custom_call.1} parent=55 // pred_fallthru
          _
        %s577 = sand.u32 %s38, 1
        %s578 = scalar_lea.sflag [#allocation15], %s577
        %s579 = sand.u32 %s200, 1
        %s580 = smul.addr %s579, 512
        %s581 = scalar_lea.vmem [#allocation14], %s580
        // Predicated region
        $region77: #{tpu_custom_call.1} parent=55 // pred_check
          %p582 = pneg %p213
        $region78: #{tpu_custom_call.1} parent=55 // pred_check_branch
          %584 = sbr.rel (%p582) target = $region80
        $region79: #{tpu_custom_call.1} parent=55 // pred_region
          %585 = dma.done %s578, 8192
        $region80: #{tpu_custom_call.1} parent=55 // pred_fallthru
          _
        %s586 = sand.u32 %s38, 1
        %s587 = scalar_lea.sflag [#allocation15], %s586
        %s588 = sand.u32 %s226, 1
        %s589 = smul.addr %s588, 4
        %s590 = scalar_lea.vmem [#allocation16], %s589
        // Predicated region
        $region81: #{tpu_custom_call.1} parent=55 // pred_check
          %p591 = pneg %p239
        $region82: #{tpu_custom_call.1} parent=55 // pred_check_branch
          %593 = sbr.rel (%p591) target = $region84
        $region83: #{tpu_custom_call.1} parent=55 // pred_region
          %594 = dma.done %s587, 64
        $region84: #{tpu_custom_call.1} parent=55 // pred_fallthru
          _
        %s595 = sand.u32 %s38, 1
        %s596 = scalar_lea.sflag [#allocation18], %s595
        %s597 = sand.u32 %s252, 1
        %s598 = smul.addr %s597, 4
        %s599 = scalar_lea.vmem [#allocation17], %s598
        // Predicated region
        $region85: #{tpu_custom_call.1} parent=55 // pred_check
          %p600 = pneg %p265
        $region86: #{tpu_custom_call.1} parent=55 // pred_check_branch
          %602 = sbr.rel (%p600) target = $region88
        $region87: #{tpu_custom_call.1} parent=55 // pred_region
          %603 = dma.done %s596, 64
        $region88: #{tpu_custom_call.1} parent=55 // pred_fallthru
          _
        %s604 = sand.u32 %s38, 1
        %s605 = scalar_lea.sflag [#allocation18], %s604
        %s606 = sand.u32 %s278, 1
        %s607 = smul.addr %s606, 4
        %s608 = scalar_lea.vmem [#allocation19], %s607
        // Predicated region
        $region89: #{tpu_custom_call.1} parent=55 // pred_check
          %p609 = pneg %p291
        $region90: #{tpu_custom_call.1} parent=55 // pred_check_branch
          %611 = sbr.rel (%p609) target = $region92
        $region91: #{tpu_custom_call.1} parent=55 // pred_region
          %612 = dma.done %s605, 64
        $region92: #{tpu_custom_call.1} parent=55 // pred_fallthru
          _
        %s613 = sand.u32 %s60, 1
        %s614 = scalar_lea.sflag [#allocation6], %s613
        %s615 = sand.u32 %s60, 1
        %s616 = smul.addr %s615, 2
        %s617 = scalar_lea.vmem [#allocation5], %s616
        %p618 = pneg %p73
        %p619 = pneg %p70
        %s620 = sand.u32 %s38, 1
        %s621 = scalar_lea.sflag [#allocation9], %s620
        %s622 = sand.u32 %s88, 1
        %s623 = smul.addr %s622, 2
        %s624 = scalar_lea.vmem [#allocation8], %s623
        %p625 = pneg %p101
        %p626 = pneg %p98
        %s627 = sand.u32 %s38, 1
        %s628 = scalar_lea.sflag [#allocation9], %s627
        %s629 = sand.u32 %s116, 1
        %s630 = smul.addr %s629, 2
        %s631 = scalar_lea.vmem [#allocation10], %s630
        %p632 = pneg %p129
        %p633 = pneg %p126
        %s634 = sand.u32 %s38, 1
        %s635 = scalar_lea.sflag [#allocation12], %s634
        %s636 = sand.u32 %s144, 1
        %s637 = smul.addr %s636, 512
        %s638 = scalar_lea.vmem [#allocation11], %s637
        %p639 = pneg %p157
        %p640 = pneg %p154
        %s641 = sand.u32 %s38, 1
        %s642 = scalar_lea.sflag [#allocation12], %s641
        %s643 = sand.u32 %s172, 1
        %s644 = smul.addr %s643, 512
        %s645 = scalar_lea.vmem [#allocation13], %s644
        %p646 = pneg %p185
        %p647 = pneg %p182
        %s648 = sand.u32 %s38, 1
        %s649 = scalar_lea.sflag [#allocation15], %s648
        %s650 = sand.u32 %s200, 1
        %s651 = smul.addr %s650, 512
        %s652 = scalar_lea.vmem [#allocation14], %s651
        %p653 = pneg %p213
        %p654 = pneg %p210
        %s655 = sand.u32 %s38, 1
        %s656 = scalar_lea.sflag [#allocation15], %s655
        %s657 = sand.u32 %s226, 1
        %s658 = smul.addr %s657, 4
        %s659 = scalar_lea.vmem [#allocation16], %s658
        %p660 = pneg %p239
        %p661 = pneg %p236
        %s662 = sand.u32 %s38, 1
        %s663 = scalar_lea.sflag [#allocation18], %s662
        %s664 = sand.u32 %s252, 1
        %s665 = smul.addr %s664, 4
        %s666 = scalar_lea.vmem [#allocation17], %s665
        %p667 = pneg %p265
        %p668 = pneg %p262
        %s669 = sand.u32 %s38, 1
        %s670 = scalar_lea.sflag [#allocation18], %s669
        %s671 = sand.u32 %s278, 1
        %s672 = smul.addr %s671, 4
        %s673 = scalar_lea.vmem [#allocation19], %s672
        %p674 = pneg %p291
        %p675 = pneg %p288
        %p676 = pneg %p317
        %p677 = pneg %p314
        %s678 = sand.u32 %s304, 1
        %s679 = scalar_lea.sflag [#allocation7], %s678
        %s680 = sand.u32 %s304, 1
        %s681 = smul.addr %s680, 8
        %s682 = scalar_lea.vmem [#allocation20], %s681
        %s683 = smul.u32 16, %s43
        %s684 = smul.u32 16, %s43
        %s685 = smul.u32 16, %s43
        %p686 = scmp.eq.s32.totalorder %s43, 0
        // Predicated region
        $region93: #{tpu_custom_call.1} parent=55 // pred_check
          %p687 = pneg %p686
        $region94: #{tpu_custom_call.1} parent=55 // pred_check_branch
          %689 = sbr.rel (%p687) target = $region96
        $region95: #{tpu_custom_call.1} parent=55 // pred_region
          %v690 = vld [vmem:[%s590] sm:$0xf]
          %v692 = vlaneseq
          %v693 = vshrl.u32 %v692, 7
          %v694 = vsub.s32 0, %v693
          %v695 = vrot.slane %v690, %v694
          %v696 = vlaneseq
          %v697 = vshrl.u32 %v696, 7
          %v698 = vsub.s32 1, %v697
          %v699 = vrot.slane %v690, %v698
          %v700 = vlaneseq
          %v701 = vshrl.u32 %v700, 7
          %v702 = vsub.s32 2, %v701
          %v703 = vrot.slane %v690, %v702
          %v704 = vlaneseq
          %v705 = vshrl.u32 %v704, 7
          %v706 = vsub.s32 3, %v705
          %v707 = vrot.slane %v690, %v706
          %v708 = vcombine.low %v695, %v699
          %v709 = vcombine.low %v703, %v707
          %v711 = vunpack.c.l.s4 1983009808
          %v712 = vunpack.c.0.s8 %v711
          %v713 = vlaneseq
          %v714 = vshrl.u32 %v713, 7
          %v715 = vsub.s32 %v712, %v714
          %v716 = vrot.slane %v708, %v715
          %v718 = vunpack.c.l.s4 1983009808
          %v719 = vunpack.c.0.s8 %v718
          %v720 = vlaneseq
          %v721 = vshrl.u32 %v720, 7
          %v722 = vsub.s32 %v719, %v721
          %v723 = vrot.slane %v709, %v722
          %v724 = vcombine.low %v716, %v723
          %726 = vst [vmem:[#allocation2] sm:$0xff] %v724
          %v727 = vld [vmem:[%s599] sm:$0xf]
          %v729 = vlaneseq
          %v730 = vshrl.u32 %v729, 7
          %v731 = vsub.s32 0, %v730
          %v732 = vrot.slane %v727, %v731
          %v733 = vlaneseq
          %v734 = vshrl.u32 %v733, 7
          %v735 = vsub.s32 1, %v734
          %v736 = vrot.slane %v727, %v735
          %v737 = vlaneseq
          %v738 = vshrl.u32 %v737, 7
          %v739 = vsub.s32 2, %v738
          %v740 = vrot.slane %v727, %v739
          %v741 = vlaneseq
          %v742 = vshrl.u32 %v741, 7
          %v743 = vsub.s32 3, %v742
          %v744 = vrot.slane %v727, %v743
          %v745 = vcombine.low %v732, %v736
          %v746 = vcombine.low %v740, %v744
          %v748 = vunpack.c.l.s4 1983009808
          %v749 = vunpack.c.0.s8 %v748
          %v750 = vlaneseq
          %v751 = vshrl.u32 %v750, 7
          %v752 = vsub.s32 %v749, %v751
          %v753 = vrot.slane %v745, %v752
          %v755 = vunpack.c.l.s4 1983009808
          %v756 = vunpack.c.0.s8 %v755
          %v757 = vlaneseq
          %v758 = vshrl.u32 %v757, 7
          %v759 = vsub.s32 %v756, %v758
          %v760 = vrot.slane %v746, %v759
          %v761 = vcombine.low %v753, %v760
          %763 = vst [vmem:[#allocation3] sm:$0xff] %v761
          %v764 = vld [vmem:[%s608] sm:$0xf]
          %v766 = vlaneseq
          %v767 = vshrl.u32 %v766, 7
          %v768 = vsub.s32 0, %v767
          %v769 = vrot.slane %v764, %v768
          %v770 = vlaneseq
          %v771 = vshrl.u32 %v770, 7
          %v772 = vsub.s32 1, %v771
          %v773 = vrot.slane %v764, %v772
          %v774 = vlaneseq
          %v775 = vshrl.u32 %v774, 7
          %v776 = vsub.s32 2, %v775
          %v777 = vrot.slane %v764, %v776
          %v778 = vlaneseq
          %v779 = vshrl.u32 %v778, 7
          %v780 = vsub.s32 3, %v779
          %v781 = vrot.slane %v764, %v780
          %v782 = vcombine.low %v769, %v773
          %v783 = vcombine.low %v777, %v781
          %v785 = vunpack.c.l.s4 1983009808
          %v786 = vunpack.c.0.s8 %v785
          %v787 = vlaneseq
          %v788 = vshrl.u32 %v787, 7
          %v789 = vsub.s32 %v786, %v788
          %v790 = vrot.slane %v782, %v789
          %v792 = vunpack.c.l.s4 1983009808
          %v793 = vunpack.c.0.s8 %v792
          %v794 = vlaneseq
          %v795 = vshrl.u32 %v794, 7
          %v796 = vsub.s32 %v793, %v795
          %v797 = vrot.slane %v783, %v796
          %v798 = vcombine.low %v790, %v797
          %800 = vst [vmem:[#allocation4] sm:$0xff] %v798
        $region96: #{tpu_custom_call.1} parent=55 // pred_fallthru
          _
        %v801 = vld [vmem:[#allocation2] sm:$0xff]
        %v802 = vld [vmem:[%s536] sm:$0x3]
        %v803 = vld [vmem:[%s563] sm:$0xff]
        %v804 = vld [vmem:[%s563 + $0x8] sm:$0xff]
        %v805 = vld [vmem:[%s563 + $0x10] sm:$0xff]
        %v806 = vld [vmem:[%s563 + $0x18] sm:$0xff]
        %v807 = vld [vmem:[%s563 + $0x20] sm:$0xff]
        %v808 = vld [vmem:[%s563 + $0x28] sm:$0xff]
        %v809 = vld [vmem:[%s563 + $0x30] sm:$0xff]
        %v810 = vld [vmem:[%s563 + $0x38] sm:$0xff]
        %v811 = vld [vmem:[%s563 + $0x40] sm:$0xff]
        %v812 = vld [vmem:[%s563 + $0x48] sm:$0xff]
        %v813 = vld [vmem:[%s563 + $0x50] sm:$0xff]
        %v814 = vld [vmem:[%s563 + $0x58] sm:$0xff]
        %v815 = vld [vmem:[%s563 + $0x60] sm:$0xff]
        %v816 = vld [vmem:[%s563 + $0x68] sm:$0xff]
        %v817 = vld [vmem:[%s563 + $0x70] sm:$0xff]
        %v818 = vld [vmem:[%s563 + $0x78] sm:$0xff]
        %v819 = vld [vmem:[%s563 + $0x80] sm:$0xff]
        %v820 = vld [vmem:[%s563 + $0x88] sm:$0xff]
        %v821 = vld [vmem:[%s563 + $0x90] sm:$0xff]
        %v822 = vld [vmem:[%s563 + $0x98] sm:$0xff]
        %v823 = vld [vmem:[%s563 + $0xa0] sm:$0xff]
        %v824 = vld [vmem:[%s563 + $0xa8] sm:$0xff]
        %v825 = vld [vmem:[%s563 + $0xb0] sm:$0xff]
        %v826 = vld [vmem:[%s563 + $0xb8] sm:$0xff]
        %v827 = vld [vmem:[%s563 + $0xc0] sm:$0xff]
        %v828 = vld [vmem:[%s563 + $0xc8] sm:$0xff]
        %v829 = vld [vmem:[%s563 + $0xd0] sm:$0xff]
        %v830 = vld [vmem:[%s563 + $0xd8] sm:$0xff]
        %v831 = vld [vmem:[%s563 + $0xe0] sm:$0xff]
        %v832 = vld [vmem:[%s563 + $0xe8] sm:$0xff]
        %v833 = vld [vmem:[%s563 + $0xf0] sm:$0xff]
        %v834 = vld [vmem:[%s563 + $0xf8] sm:$0xff]
        %v835 = vld [vmem:[%s563 + $0x100] sm:$0xff]
        %v836 = vld [vmem:[%s563 + $0x108] sm:$0xff]
        %v837 = vld [vmem:[%s563 + $0x110] sm:$0xff]
        %v838 = vld [vmem:[%s563 + $0x118] sm:$0xff]
        %v839 = vld [vmem:[%s563 + $0x120] sm:$0xff]
        %v840 = vld [vmem:[%s563 + $0x128] sm:$0xff]
        %v841 = vld [vmem:[%s563 + $0x130] sm:$0xff]
        %v842 = vld [vmem:[%s563 + $0x138] sm:$0xff]
        %v843 = vld [vmem:[%s563 + $0x140] sm:$0xff]
        %v844 = vld [vmem:[%s563 + $0x148] sm:$0xff]
        %v845 = vld [vmem:[%s563 + $0x150] sm:$0xff]
        %v846 = vld [vmem:[%s563 + $0x158] sm:$0xff]
        %v847 = vld [vmem:[%s563 + $0x160] sm:$0xff]
        %v848 = vld [vmem:[%s563 + $0x168] sm:$0xff]
        %v849 = vld [vmem:[%s563 + $0x170] sm:$0xff]
        %v850 = vld [vmem:[%s563 + $0x178] sm:$0xff]
        %v851 = vld [vmem:[%s563 + $0x180] sm:$0xff]
        %v852 = vld [vmem:[%s563 + $0x188] sm:$0xff]
        %v853 = vld [vmem:[%s563 + $0x190] sm:$0xff]
        %v854 = vld [vmem:[%s563 + $0x198] sm:$0xff]
        %v855 = vld [vmem:[%s563 + $0x1a0] sm:$0xff]
        %v856 = vld [vmem:[%s563 + $0x1a8] sm:$0xff]
        %v857 = vld [vmem:[%s563 + $0x1b0] sm:$0xff]
        %v858 = vld [vmem:[%s563 + $0x1b8] sm:$0xff]
        %v859 = vld [vmem:[%s563 + $0x1c0] sm:$0xff]
        %v860 = vld [vmem:[%s563 + $0x1c8] sm:$0xff]
        %v861 = vld [vmem:[%s563 + $0x1d0] sm:$0xff]
        %v862 = vld [vmem:[%s563 + $0x1d8] sm:$0xff]
        %v863 = vld [vmem:[%s563 + $0x1e0] sm:$0xff]
        %v864 = vld [vmem:[%s563 + $0x1e8] sm:$0xff]
        %v865 = vld [vmem:[%s563 + $0x1f0] sm:$0xff]
        %v866 = vld [vmem:[%s563 + $0x1f8] sm:$0xff]
        %867 = vmatprep.subr.mxu0 %v804
        %868 = vmatpush1.msra.mxu0 %v803
        %869 = vmatprep.subr.mxu0 %v808
        %870 = vmatpush1.msra.mxu0 %v807
        %871 = vmatprep.subr.mxu0 %v812
        %872 = vmatpush1.msra.mxu0 %v811
        %873 = vmatprep.subr.mxu0 %v816
        %874 = vmatpush1.msra.mxu0 %v815
        %875 = vmatprep.subr.mxu0 %v820
        %876 = vmatpush1.msra.mxu0 %v819
        %877 = vmatprep.subr.mxu0 %v824
        %878 = vmatpush1.msra.mxu0 %v823
        %879 = vmatprep.subr.mxu0 %v828
        %880 = vmatpush1.msra.mxu0 %v827
        %881 = vmatprep.subr.mxu0 %v832
        %882 = vmatpush1.msra.mxu0 %v831
        %883 = vmatprep.subr.mxu0 %v836
        %884 = vmatpush1.msra.mxu0 %v835
        %885 = vmatprep.subr.mxu0 %v840
        %886 = vmatpush1.msra.mxu0 %v839
        %887 = vmatprep.subr.mxu0 %v844
        %888 = vmatpush1.msra.mxu0 %v843
        %889 = vmatprep.subr.mxu0 %v848
        %890 = vmatpush1.msra.mxu0 %v847
        %891 = vmatprep.subr.mxu0 %v852
        %892 = vmatpush1.msra.mxu0 %v851
        %893 = vmatprep.subr.mxu0 %v856
        %894 = vmatpush1.msra.mxu0 %v855
        %895 = vmatprep.subr.mxu0 %v860
        %896 = vmatpush1.msra.mxu0 %v859
        %897 = vmatprep.subr.mxu0 %v864
        %898 = vmatpush1.msra.mxu0 %v863
        %899 = vmatprep.subr.mxu0 0.0
        %900 = vmatpush1.msra.mxu0 0.0
        %901 = vmatprep.subr.mxu0 0.0
        %902 = vmatpush1.msra.mxu0 0.0
        %903 = vmatprep.subr.mxu0 0.0
        %904 = vmatpush1.msra.mxu0 0.0
        %905 = vmatprep.subr.mxu0 0.0
        %906 = vmatpush1.msra.mxu0 0.0
        %907 = vmatprep.subr.mxu0 0.0
        %908 = vmatpush1.msra.mxu0 0.0
        %909 = vmatprep.subr.mxu0 0.0
        %910 = vmatpush1.msra.mxu0 0.0
        %911 = vmatprep.subr.mxu0 0.0
        %912 = vmatpush1.msra.mxu0 0.0
        %913 = vmatprep.subr.mxu0 0.0
        %914 = vmatpush1.msra.mxu0 0.0
        %915 = vmatprep.subr.mxu0 0.0
        %916 = vmatpush1.msra.mxu0 0.0
        %917 = vmatprep.subr.mxu0 0.0
        %918 = vmatpush1.msra.mxu0 0.0
        %919 = vmatprep.subr.mxu0 0.0
        %920 = vmatpush1.msra.mxu0 0.0
        %921 = vmatprep.subr.mxu0 0.0
        %922 = vmatpush1.msra.mxu0 0.0
        %923 = vmatprep.subr.mxu0 0.0
        %924 = vmatpush1.msra.mxu0 0.0
        %925 = vmatprep.subr.mxu0 0.0
        %926 = vmatpush1.msra.mxu0 0.0
        %927 = vmatprep.subr.mxu0 0.0
        %928 = vmatpush1.msra.mxu0 0.0
        %929 = vmatprep.subr.mxu0 0.0
        %930 = vmatpush1.msra.mxu0 0.0
        %931 = vmatprep.mubr.f32.mxu0 0.0
        %932 = vmatmul.mubr.f32.gmra.mrb[0].mxu0 %v802
        %v933 = vpop.f32.mrb[0].mxu0
        %v934 = vadd.f32 0.0, %v933
        %v935 = vpop.f32.mrb[0].mxu0
        %v936 = vadd.f32 0.0, %v935
        %937 = vdwg.mxu0
        %938 = vmatprep.subr.mxu0 %v806
        %939 = vmatpush1.msra.mxu0 %v805
        %940 = vmatprep.subr.mxu0 %v810
        %941 = vmatpush1.msra.mxu0 %v809
        %942 = vmatprep.subr.mxu0 %v814
        %943 = vmatpush1.msra.mxu0 %v813
        %944 = vmatprep.subr.mxu0 %v818
        %945 = vmatpush1.msra.mxu0 %v817
        %946 = vmatprep.subr.mxu0 %v822
        %947 = vmatpush1.msra.mxu0 %v821
        %948 = vmatprep.subr.mxu0 %v826
        %949 = vmatpush1.msra.mxu0 %v825
        %950 = vmatprep.subr.mxu0 %v830
        %951 = vmatpush1.msra.mxu0 %v829
        %952 = vmatprep.subr.mxu0 %v834
        %953 = vmatpush1.msra.mxu0 %v833
        %954 = vmatprep.subr.mxu0 %v838
        %955 = vmatpush1.msra.mxu0 %v837
        %956 = vmatprep.subr.mxu0 %v842
        %957 = vmatpush1.msra.mxu0 %v841
        %958 = vmatprep.subr.mxu0 %v846
        %959 = vmatpush1.msra.mxu0 %v845
        %960 = vmatprep.subr.mxu0 %v850
        %961 = vmatpush1.msra.mxu0 %v849
        %962 = vmatprep.subr.mxu0 %v854
        %963 = vmatpush1.msra.mxu0 %v853
        %964 = vmatprep.subr.mxu0 %v858
        %965 = vmatpush1.msra.mxu0 %v857
        %966 = vmatprep.subr.mxu0 %v862
        %967 = vmatpush1.msra.mxu0 %v861
        %968 = vmatprep.subr.mxu0 %v866
        %969 = vmatpush1.msra.mxu0 %v865
        %970 = vmatprep.subr.mxu0 0.0
        %971 = vmatpush1.msra.mxu0 0.0
        %972 = vmatprep.subr.mxu0 0.0
        %973 = vmatpush1.msra.mxu0 0.0
        %974 = vmatprep.subr.mxu0 0.0
        %975 = vmatpush1.msra.mxu0 0.0
        %976 = vmatprep.subr.mxu0 0.0
        %977 = vmatpush1.msra.mxu0 0.0
        %978 = vmatprep.subr.mxu0 0.0
        %979 = vmatpush1.msra.mxu0 0.0
        %980 = vmatprep.subr.mxu0 0.0
        %981 = vmatpush1.msra.mxu0 0.0
        %982 = vmatprep.subr.mxu0 0.0
        %983 = vmatpush1.msra.mxu0 0.0
        %984 = vmatprep.subr.mxu0 0.0
        %985 = vmatpush1.msra.mxu0 0.0
        %986 = vmatprep.subr.mxu0 0.0
        %987 = vmatpush1.msra.mxu0 0.0
        %988 = vmatprep.subr.mxu0 0.0
        %989 = vmatpush1.msra.mxu0 0.0
        %990 = vmatprep.subr.mxu0 0.0
        %991 = vmatpush1.msra.mxu0 0.0
        %992 = vmatprep.subr.mxu0 0.0
        %993 = vmatpush1.msra.mxu0 0.0
        %994 = vmatprep.subr.mxu0 0.0
        %995 = vmatpush1.msra.mxu0 0.0
        %996 = vmatprep.subr.mxu0 0.0
        %997 = vmatpush1.msra.mxu0 0.0
        %998 = vmatprep.subr.mxu0 0.0
        %999 = vmatpush1.msra.mxu0 0.0
        %1000 = vmatprep.subr.mxu0 0.0
        %1001 = vmatpush1.msra.mxu0 0.0
        %1002 = vmatprep.mubr.f32.mxu0 0.0
        %1003 = vmatmul.mubr.f32.gmra.mrb[0].mxu0 %v802
        %v1004 = vpop.f32.mrb[0].mxu0
        %v1005 = vadd.f32 0.0, %v1004
        %v1006 = vpop.f32.mrb[0].mxu0
        %v1007 = vadd.f32 0.0, %v1006
        %1008 = vdwg.mxu0
        %v1013 = vcombine.low %v934, %v936
        %v1014 = vcombine.low %v1005, %v1007
        %v1016 = vunpack.c.l.s4 1983009808
        %v1017 = vunpack.c.0.s8 %v1016
        %v1018 = vlaneseq
        %v1019 = vshrl.u32 %v1018, 7
        %v1020 = vsub.s32 %v1017, %v1019
        %v1021 = vrot.slane %v1013, %v1020
        %v1023 = vunpack.c.l.s4 1983009808
        %v1024 = vunpack.c.0.s8 %v1023
        %v1025 = vlaneseq
        %v1026 = vshrl.u32 %v1025, 7
        %v1027 = vsub.s32 %v1024, %v1026
        %v1028 = vrot.slane %v1014, %v1027
        %v1029 = vcombine.low %v1021, %v1028
        %v1031 = vadd.f32 %v801, %v1029
        %1032 = vst [vmem:[#allocation2] sm:$0xff] %v1031
        %v1033 = vld [vmem:[#allocation3] sm:$0xff]
        %v1034 = vld [vmem:[%s545] sm:$0x3]
        %v1035 = vld [vmem:[%s572] sm:$0xff]
        %v1036 = vld [vmem:[%s572 + $0x8] sm:$0xff]
        %v1037 = vld [vmem:[%s572 + $0x10] sm:$0xff]
        %v1038 = vld [vmem:[%s572 + $0x18] sm:$0xff]
        %v1039 = vld [vmem:[%s572 + $0x20] sm:$0xff]
        %v1040 = vld [vmem:[%s572 + $0x28] sm:$0xff]
        %v1041 = vld [vmem:[%s572 + $0x30] sm:$0xff]
        %v1042 = vld [vmem:[%s572 + $0x38] sm:$0xff]
        %v1043 = vld [vmem:[%s572 + $0x40] sm:$0xff]
        %v1044 = vld [vmem:[%s572 + $0x48] sm:$0xff]
        %v1045 = vld [vmem:[%s572 + $0x50] sm:$0xff]
        %v1046 = vld [vmem:[%s572 + $0x58] sm:$0xff]
        %v1047 = vld [vmem:[%s572 + $0x60] sm:$0xff]
        %v1048 = vld [vmem:[%s572 + $0x68] sm:$0xff]
        %v1049 = vld [vmem:[%s572 + $0x70] sm:$0xff]
        %v1050 = vld [vmem:[%s572 + $0x78] sm:$0xff]
        %v1051 = vld [vmem:[%s572 + $0x80] sm:$0xff]
        %v1052 = vld [vmem:[%s572 + $0x88] sm:$0xff]
        %v1053 = vld [vmem:[%s572 + $0x90] sm:$0xff]
        %v1054 = vld [vmem:[%s572 + $0x98] sm:$0xff]
        %v1055 = vld [vmem:[%s572 + $0xa0] sm:$0xff]
        %v1056 = vld [vmem:[%s572 + $0xa8] sm:$0xff]
        %v1057 = vld [vmem:[%s572 + $0xb0] sm:$0xff]
        %v1058 = vld [vmem:[%s572 + $0xb8] sm:$0xff]
        %v1059 = vld [vmem:[%s572 + $0xc0] sm:$0xff]
        %v1060 = vld [vmem:[%s572 + $0xc8] sm:$0xff]
        %v1061 = vld [vmem:[%s572 + $0xd0] sm:$0xff]
        %v1062 = vld [vmem:[%s572 + $0xd8] sm:$0xff]
        %v1063 = vld [vmem:[%s572 + $0xe0] sm:$0xff]
        %v1064 = vld [vmem:[%s572 + $0xe8] sm:$0xff]
        %v1065 = vld [vmem:[%s572 + $0xf0] sm:$0xff]
        %v1066 = vld [vmem:[%s572 + $0xf8] sm:$0xff]
        %v1067 = vld [vmem:[%s572 + $0x100] sm:$0xff]
        %v1068 = vld [vmem:[%s572 + $0x108] sm:$0xff]
        %v1069 = vld [vmem:[%s572 + $0x110] sm:$0xff]
        %v1070 = vld [vmem:[%s572 + $0x118] sm:$0xff]
        %v1071 = vld [vmem:[%s572 + $0x120] sm:$0xff]
        %v1072 = vld [vmem:[%s572 + $0x128] sm:$0xff]
        %v1073 = vld [vmem:[%s572 + $0x130] sm:$0xff]
        %v1074 = vld [vmem:[%s572 + $0x138] sm:$0xff]
        %v1075 = vld [vmem:[%s572 + $0x140] sm:$0xff]
        %v1076 = vld [vmem:[%s572 + $0x148] sm:$0xff]
        %v1077 = vld [vmem:[%s572 + $0x150] sm:$0xff]
        %v1078 = vld [vmem:[%s572 + $0x158] sm:$0xff]
        %v1079 = vld [vmem:[%s572 + $0x160] sm:$0xff]
        %v1080 = vld [vmem:[%s572 + $0x168] sm:$0xff]
        %v1081 = vld [vmem:[%s572 + $0x170] sm:$0xff]
        %v1082 = vld [vmem:[%s572 + $0x178] sm:$0xff]
        %v1083 = vld [vmem:[%s572 + $0x180] sm:$0xff]
        %v1084 = vld [vmem:[%s572 + $0x188] sm:$0xff]
        %v1085 = vld [vmem:[%s572 + $0x190] sm:$0xff]
        %v1086 = vld [vmem:[%s572 + $0x198] sm:$0xff]
        %v1087 = vld [vmem:[%s572 + $0x1a0] sm:$0xff]
        %v1088 = vld [vmem:[%s572 + $0x1a8] sm:$0xff]
        %v1089 = vld [vmem:[%s572 + $0x1b0] sm:$0xff]
        %v1090 = vld [vmem:[%s572 + $0x1b8] sm:$0xff]
        %v1091 = vld [vmem:[%s572 + $0x1c0] sm:$0xff]
        %v1092 = vld [vmem:[%s572 + $0x1c8] sm:$0xff]
        %v1093 = vld [vmem:[%s572 + $0x1d0] sm:$0xff]
        %v1094 = vld [vmem:[%s572 + $0x1d8] sm:$0xff]
        %v1095 = vld [vmem:[%s572 + $0x1e0] sm:$0xff]
        %v1096 = vld [vmem:[%s572 + $0x1e8] sm:$0xff]
        %v1097 = vld [vmem:[%s572 + $0x1f0] sm:$0xff]
        %v1098 = vld [vmem:[%s572 + $0x1f8] sm:$0xff]
        %1099 = vmatprep.subr.mxu0 %v1036
        %1100 = vmatpush1.msra.mxu0 %v1035
        %1101 = vmatprep.subr.mxu0 %v1040
        %1102 = vmatpush1.msra.mxu0 %v1039
        %1103 = vmatprep.subr.mxu0 %v1044
        %1104 = vmatpush1.msra.mxu0 %v1043
        %1105 = vmatprep.subr.mxu0 %v1048
        %1106 = vmatpush1.msra.mxu0 %v1047
        %1107 = vmatprep.subr.mxu0 %v1052
        %1108 = vmatpush1.msra.mxu0 %v1051
        %1109 = vmatprep.subr.mxu0 %v1056
        %1110 = vmatpush1.msra.mxu0 %v1055
        %1111 = vmatprep.subr.mxu0 %v1060
        %1112 = vmatpush1.msra.mxu0 %v1059
        %1113 = vmatprep.subr.mxu0 %v1064
        %1114 = vmatpush1.msra.mxu0 %v1063
        %1115 = vmatprep.subr.mxu0 %v1068
        %1116 = vmatpush1.msra.mxu0 %v1067
        %1117 = vmatprep.subr.mxu0 %v1072
        %1118 = vmatpush1.msra.mxu0 %v1071
        %1119 = vmatprep.subr.mxu0 %v1076
        %1120 = vmatpush1.msra.mxu0 %v1075
        %1121 = vmatprep.subr.mxu0 %v1080
        %1122 = vmatpush1.msra.mxu0 %v1079
        %1123 = vmatprep.subr.mxu0 %v1084
        %1124 = vmatpush1.msra.mxu0 %v1083
        %1125 = vmatprep.subr.mxu0 %v1088
        %1126 = vmatpush1.msra.mxu0 %v1087
        %1127 = vmatprep.subr.mxu0 %v1092
        %1128 = vmatpush1.msra.mxu0 %v1091
        %1129 = vmatprep.subr.mxu0 %v1096
        %1130 = vmatpush1.msra.mxu0 %v1095
        %1131 = vmatprep.subr.mxu0 0.0
        %1132 = vmatpush1.msra.mxu0 0.0
        %1133 = vmatprep.subr.mxu0 0.0
        %1134 = vmatpush1.msra.mxu0 0.0
        %1135 = vmatprep.subr.mxu0 0.0
        %1136 = vmatpush1.msra.mxu0 0.0
        %1137 = vmatprep.subr.mxu0 0.0
        %1138 = vmatpush1.msra.mxu0 0.0
        %1139 = vmatprep.subr.mxu0 0.0
        %1140 = vmatpush1.msra.mxu0 0.0
        %1141 = vmatprep.subr.mxu0 0.0
        %1142 = vmatpush1.msra.mxu0 0.0
        %1143 = vmatprep.subr.mxu0 0.0
        %1144 = vmatpush1.msra.mxu0 0.0
        %1145 = vmatprep.subr.mxu0 0.0
        %1146 = vmatpush1.msra.mxu0 0.0
        %1147 = vmatprep.subr.mxu0 0.0
        %1148 = vmatpush1.msra.mxu0 0.0
        %1149 = vmatprep.subr.mxu0 0.0
        %1150 = vmatpush1.msra.mxu0 0.0
        %1151 = vmatprep.subr.mxu0 0.0
        %1152 = vmatpush1.msra.mxu0 0.0
        %1153 = vmatprep.subr.mxu0 0.0
        %1154 = vmatpush1.msra.mxu0 0.0
        %1155 = vmatprep.subr.mxu0 0.0
        %1156 = vmatpush1.msra.mxu0 0.0
        %1157 = vmatprep.subr.mxu0 0.0
        %1158 = vmatpush1.msra.mxu0 0.0
        %1159 = vmatprep.subr.mxu0 0.0
        %1160 = vmatpush1.msra.mxu0 0.0
        %1161 = vmatprep.subr.mxu0 0.0
        %1162 = vmatpush1.msra.mxu0 0.0
        %1163 = vmatprep.mubr.f32.mxu0 0.0
        %1164 = vmatmul.mubr.f32.gmra.mrb[0].mxu0 %v1034
        %v1165 = vpop.f32.mrb[0].mxu0
        %v1166 = vadd.f32 0.0, %v1165
        %v1167 = vpop.f32.mrb[0].mxu0
        %v1168 = vadd.f32 0.0, %v1167
        %1169 = vdwg.mxu0
        %1170 = vmatprep.subr.mxu0 %v1038
        %1171 = vmatpush1.msra.mxu0 %v1037
        %1172 = vmatprep.subr.mxu0 %v1042
        %1173 = vmatpush1.msra.mxu0 %v1041
        %1174 = vmatprep.subr.mxu0 %v1046
        %1175 = vmatpush1.msra.mxu0 %v1045
        %1176 = vmatprep.subr.mxu0 %v1050
        %1177 = vmatpush1.msra.mxu0 %v1049
        %1178 = vmatprep.subr.mxu0 %v1054
        %1179 = vmatpush1.msra.mxu0 %v1053
        %1180 = vmatprep.subr.mxu0 %v1058
        %1181 = vmatpush1.msra.mxu0 %v1057
        %1182 = vmatprep.subr.mxu0 %v1062
        %1183 = vmatpush1.msra.mxu0 %v1061
        %1184 = vmatprep.subr.mxu0 %v1066
        %1185 = vmatpush1.msra.mxu0 %v1065
        %1186 = vmatprep.subr.mxu0 %v1070
        %1187 = vmatpush1.msra.mxu0 %v1069
        %1188 = vmatprep.subr.mxu0 %v1074
        %1189 = vmatpush1.msra.mxu0 %v1073
        %1190 = vmatprep.subr.mxu0 %v1078
        %1191 = vmatpush1.msra.mxu0 %v1077
        %1192 = vmatprep.subr.mxu0 %v1082
        %1193 = vmatpush1.msra.mxu0 %v1081
        %1194 = vmatprep.subr.mxu0 %v1086
        %1195 = vmatpush1.msra.mxu0 %v1085
        %1196 = vmatprep.subr.mxu0 %v1090
        %1197 = vmatpush1.msra.mxu0 %v1089
        %1198 = vmatprep.subr.mxu0 %v1094
        %1199 = vmatpush1.msra.mxu0 %v1093
        %1200 = vmatprep.subr.mxu0 %v1098
        %1201 = vmatpush1.msra.mxu0 %v1097
        %1202 = vmatprep.subr.mxu0 0.0
        %1203 = vmatpush1.msra.mxu0 0.0
        %1204 = vmatprep.subr.mxu0 0.0
        %1205 = vmatpush1.msra.mxu0 0.0
        %1206 = vmatprep.subr.mxu0 0.0
        %1207 = vmatpush1.msra.mxu0 0.0
        %1208 = vmatprep.subr.mxu0 0.0
        %1209 = vmatpush1.msra.mxu0 0.0
        %1210 = vmatprep.subr.mxu0 0.0
        %1211 = vmatpush1.msra.mxu0 0.0
        %1212 = vmatprep.subr.mxu0 0.0
        %1213 = vmatpush1.msra.mxu0 0.0
        %1214 = vmatprep.subr.mxu0 0.0
        %1215 = vmatpush1.msra.mxu0 0.0
        %1216 = vmatprep.subr.mxu0 0.0
        %1217 = vmatpush1.msra.mxu0 0.0
        %1218 = vmatprep.subr.mxu0 0.0
        %1219 = vmatpush1.msra.mxu0 0.0
        %1220 = vmatprep.subr.mxu0 0.0
        %1221 = vmatpush1.msra.mxu0 0.0
        %1222 = vmatprep.subr.mxu0 0.0
        %1223 = vmatpush1.msra.mxu0 0.0
        %1224 = vmatprep.subr.mxu0 0.0
        %1225 = vmatpush1.msra.mxu0 0.0
        %1226 = vmatprep.subr.mxu0 0.0
        %1227 = vmatpush1.msra.mxu0 0.0
        %1228 = vmatprep.subr.mxu0 0.0
        %1229 = vmatpush1.msra.mxu0 0.0
        %1230 = vmatprep.subr.mxu0 0.0
        %1231 = vmatpush1.msra.mxu0 0.0
        %1232 = vmatprep.subr.mxu0 0.0
        %1233 = vmatpush1.msra.mxu0 0.0
        %1234 = vmatprep.mubr.f32.mxu0 0.0
        %1235 = vmatmul.mubr.f32.gmra.mrb[0].mxu0 %v1034
        %v1236 = vpop.f32.mrb[0].mxu0
        %v1237 = vadd.f32 0.0, %v1236
        %v1238 = vpop.f32.mrb[0].mxu0
        %v1239 = vadd.f32 0.0, %v1238
        %1240 = vdwg.mxu0
        %v1245 = vcombine.low %v1166, %v1168
        %v1246 = vcombine.low %v1237, %v1239
        %v1248 = vunpack.c.l.s4 1983009808
        %v1249 = vunpack.c.0.s8 %v1248
        %v1250 = vlaneseq
        %v1251 = vshrl.u32 %v1250, 7
        %v1252 = vsub.s32 %v1249, %v1251
        %v1253 = vrot.slane %v1245, %v1252
        %v1255 = vunpack.c.l.s4 1983009808
        %v1256 = vunpack.c.0.s8 %v1255
        %v1257 = vlaneseq
        %v1258 = vshrl.u32 %v1257, 7
        %v1259 = vsub.s32 %v1256, %v1258
        %v1260 = vrot.slane %v1246, %v1259
        %v1261 = vcombine.low %v1253, %v1260
        %v1263 = vadd.f32 %v1033, %v1261
        %1264 = vst [vmem:[#allocation3] sm:$0xff] %v1263
        %v1265 = vld [vmem:[#allocation4] sm:$0xff]
        %v1266 = vld [vmem:[%s554] sm:$0x3]
        %v1267 = vld [vmem:[%s581] sm:$0xff]
        %v1268 = vld [vmem:[%s581 + $0x8] sm:$0xff]
        %v1269 = vld [vmem:[%s581 + $0x10] sm:$0xff]
        %v1270 = vld [vmem:[%s581 + $0x18] sm:$0xff]
        %v1271 = vld [vmem:[%s581 + $0x20] sm:$0xff]
        %v1272 = vld [vmem:[%s581 + $0x28] sm:$0xff]
        %v1273 = vld [vmem:[%s581 + $0x30] sm:$0xff]
        %v1274 = vld [vmem:[%s581 + $0x38] sm:$0xff]
        %v1275 = vld [vmem:[%s581 + $0x40] sm:$0xff]
        %v1276 = vld [vmem:[%s581 + $0x48] sm:$0xff]
        %v1277 = vld [vmem:[%s581 + $0x50] sm:$0xff]
        %v1278 = vld [vmem:[%s581 + $0x58] sm:$0xff]
        %v1279 = vld [vmem:[%s581 + $0x60] sm:$0xff]
        %v1280 = vld [vmem:[%s581 + $0x68] sm:$0xff]
        %v1281 = vld [vmem:[%s581 + $0x70] sm:$0xff]
        %v1282 = vld [vmem:[%s581 + $0x78] sm:$0xff]
        %v1283 = vld [vmem:[%s581 + $0x80] sm:$0xff]
        %v1284 = vld [vmem:[%s581 + $0x88] sm:$0xff]
        %v1285 = vld [vmem:[%s581 + $0x90] sm:$0xff]
        %v1286 = vld [vmem:[%s581 + $0x98] sm:$0xff]
        %v1287 = vld [vmem:[%s581 + $0xa0] sm:$0xff]
        %v1288 = vld [vmem:[%s581 + $0xa8] sm:$0xff]
        %v1289 = vld [vmem:[%s581 + $0xb0] sm:$0xff]
        %v1290 = vld [vmem:[%s581 + $0xb8] sm:$0xff]
        %v1291 = vld [vmem:[%s581 + $0xc0] sm:$0xff]
        %v1292 = vld [vmem:[%s581 + $0xc8] sm:$0xff]
        %v1293 = vld [vmem:[%s581 + $0xd0] sm:$0xff]
        %v1294 = vld [vmem:[%s581 + $0xd8] sm:$0xff]
        %v1295 = vld [vmem:[%s581 + $0xe0] sm:$0xff]
        %v1296 = vld [vmem:[%s581 + $0xe8] sm:$0xff]
        %v1297 = vld [vmem:[%s581 + $0xf0] sm:$0xff]
        %v1298 = vld [vmem:[%s581 + $0xf8] sm:$0xff]
        %v1299 = vld [vmem:[%s581 + $0x100] sm:$0xff]
        %v1300 = vld [vmem:[%s581 + $0x108] sm:$0xff]
        %v1301 = vld [vmem:[%s581 + $0x110] sm:$0xff]
        %v1302 = vld [vmem:[%s581 + $0x118] sm:$0xff]
        %v1303 = vld [vmem:[%s581 + $0x120] sm:$0xff]
        %v1304 = vld [vmem:[%s581 + $0x128] sm:$0xff]
        %v1305 = vld [vmem:[%s581 + $0x130] sm:$0xff]
        %v1306 = vld [vmem:[%s581 + $0x138] sm:$0xff]
        %v1307 = vld [vmem:[%s581 + $0x140] sm:$0xff]
        %v1308 = vld [vmem:[%s581 + $0x148] sm:$0xff]
        %v1309 = vld [vmem:[%s581 + $0x150] sm:$0xff]
        %v1310 = vld [vmem:[%s581 + $0x158] sm:$0xff]
        %v1311 = vld [vmem:[%s581 + $0x160] sm:$0xff]
        %v1312 = vld [vmem:[%s581 + $0x168] sm:$0xff]
        %v1313 = vld [vmem:[%s581 + $0x170] sm:$0xff]
        %v1314 = vld [vmem:[%s581 + $0x178] sm:$0xff]
        %v1315 = vld [vmem:[%s581 + $0x180] sm:$0xff]
        %v1316 = vld [vmem:[%s581 + $0x188] sm:$0xff]
        %v1317 = vld [vmem:[%s581 + $0x190] sm:$0xff]
        %v1318 = vld [vmem:[%s581 + $0x198] sm:$0xff]
        %v1319 = vld [vmem:[%s581 + $0x1a0] sm:$0xff]
        %v1320 = vld [vmem:[%s581 + $0x1a8] sm:$0xff]
        %v1321 = vld [vmem:[%s581 + $0x1b0] sm:$0xff]
        %v1322 = vld [vmem:[%s581 + $0x1b8] sm:$0xff]
        %v1323 = vld [vmem:[%s581 + $0x1c0] sm:$0xff]
        %v1324 = vld [vmem:[%s581 + $0x1c8] sm:$0xff]
        %v1325 = vld [vmem:[%s581 + $0x1d0] sm:$0xff]
        %v1326 = vld [vmem:[%s581 + $0x1d8] sm:$0xff]
        %v1327 = vld [vmem:[%s581 + $0x1e0] sm:$0xff]
        %v1328 = vld [vmem:[%s581 + $0x1e8] sm:$0xff]
        %v1329 = vld [vmem:[%s581 + $0x1f0] sm:$0xff]
        %v1330 = vld [vmem:[%s581 + $0x1f8] sm:$0xff]
        %1331 = vmatprep.subr.mxu0 %v1268
        %1332 = vmatpush1.msra.mxu0 %v1267
        %1333 = vmatprep.subr.mxu0 %v1272
        %1334 = vmatpush1.msra.mxu0 %v1271
        %1335 = vmatprep.subr.mxu0 %v1276
        %1336 = vmatpush1.msra.mxu0 %v1275
        %1337 = vmatprep.subr.mxu0 %v1280
        %1338 = vmatpush1.msra.mxu0 %v1279
        %1339 = vmatprep.subr.mxu0 %v1284
        %1340 = vmatpush1.msra.mxu0 %v1283
        %1341 = vmatprep.subr.mxu0 %v1288
        %1342 = vmatpush1.msra.mxu0 %v1287
        %1343 = vmatprep.subr.mxu0 %v1292
        %1344 = vmatpush1.msra.mxu0 %v1291
        %1345 = vmatprep.subr.mxu0 %v1296
        %1346 = vmatpush1.msra.mxu0 %v1295
        %1347 = vmatprep.subr.mxu0 %v1300
        %1348 = vmatpush1.msra.mxu0 %v1299
        %1349 = vmatprep.subr.mxu0 %v1304
        %1350 = vmatpush1.msra.mxu0 %v1303
        %1351 = vmatprep.subr.mxu0 %v1308
        %1352 = vmatpush1.msra.mxu0 %v1307
        %1353 = vmatprep.subr.mxu0 %v1312
        %1354 = vmatpush1.msra.mxu0 %v1311
        %1355 = vmatprep.subr.mxu0 %v1316
        %1356 = vmatpush1.msra.mxu0 %v1315
        %1357 = vmatprep.subr.mxu0 %v1320
        %1358 = vmatpush1.msra.mxu0 %v1319
        %1359 = vmatprep.subr.mxu0 %v1324
        %1360 = vmatpush1.msra.mxu0 %v1323
        %1361 = vmatprep.subr.mxu0 %v1328
        %1362 = vmatpush1.msra.mxu0 %v1327
        %1363 = vmatprep.subr.mxu0 0.0
        %1364 = vmatpush1.msra.mxu0 0.0
        %1365 = vmatprep.subr.mxu0 0.0
        %1366 = vmatpush1.msra.mxu0 0.0
        %1367 = vmatprep.subr.mxu0 0.0
        %1368 = vmatpush1.msra.mxu0 0.0
        %1369 = vmatprep.subr.mxu0 0.0
        %1370 = vmatpush1.msra.mxu0 0.0
        %1371 = vmatprep.subr.mxu0 0.0
        %1372 = vmatpush1.msra.mxu0 0.0
        %1373 = vmatprep.subr.mxu0 0.0
        %1374 = vmatpush1.msra.mxu0 0.0
        %1375 = vmatprep.subr.mxu0 0.0
        %1376 = vmatpush1.msra.mxu0 0.0
        %1377 = vmatprep.subr.mxu0 0.0
        %1378 = vmatpush1.msra.mxu0 0.0
        %1379 = vmatprep.subr.mxu0 0.0
        %1380 = vmatpush1.msra.mxu0 0.0
        %1381 = vmatprep.subr.mxu0 0.0
        %1382 = vmatpush1.msra.mxu0 0.0
        %1383 = vmatprep.subr.mxu0 0.0
        %1384 = vmatpush1.msra.mxu0 0.0
        %1385 = vmatprep.subr.mxu0 0.0
        %1386 = vmatpush1.msra.mxu0 0.0
        %1387 = vmatprep.subr.mxu0 0.0
        %1388 = vmatpush1.msra.mxu0 0.0
        %1389 = vmatprep.subr.mxu0 0.0
        %1390 = vmatpush1.msra.mxu0 0.0
        %1391 = vmatprep.subr.mxu0 0.0
        %1392 = vmatpush1.msra.mxu0 0.0
        %1393 = vmatprep.subr.mxu0 0.0
        %1394 = vmatpush1.msra.mxu0 0.0
        %1395 = vmatprep.mubr.f32.mxu0 0.0
        %1396 = vmatmul.mubr.f32.gmra.mrb[0].mxu0 %v1266
        %v1397 = vpop.f32.mrb[0].mxu0
        %v1398 = vadd.f32 0.0, %v1397
        %v1399 = vpop.f32.mrb[0].mxu0
        %v1400 = vadd.f32 0.0, %v1399
        %1401 = vdwg.mxu0
        %1402 = vmatprep.subr.mxu0 %v1270
        %1403 = vmatpush1.msra.mxu0 %v1269
        %1404 = vmatprep.subr.mxu0 %v1274
        %1405 = vmatpush1.msra.mxu0 %v1273
        %1406 = vmatprep.subr.mxu0 %v1278
        %1407 = vmatpush1.msra.mxu0 %v1277
        %1408 = vmatprep.subr.mxu0 %v1282
        %1409 = vmatpush1.msra.mxu0 %v1281
        %1410 = vmatprep.subr.mxu0 %v1286
        %1411 = vmatpush1.msra.mxu0 %v1285
        %1412 = vmatprep.subr.mxu0 %v1290
        %1413 = vmatpush1.msra.mxu0 %v1289
        %1414 = vmatprep.subr.mxu0 %v1294
        %1415 = vmatpush1.msra.mxu0 %v1293
        %1416 = vmatprep.subr.mxu0 %v1298
        %1417 = vmatpush1.msra.mxu0 %v1297
        %1418 = vmatprep.subr.mxu0 %v1302
        %1419 = vmatpush1.msra.mxu0 %v1301
        %1420 = vmatprep.subr.mxu0 %v1306
        %1421 = vmatpush1.msra.mxu0 %v1305
        %1422 = vmatprep.subr.mxu0 %v1310
        %1423 = vmatpush1.msra.mxu0 %v1309
        %1424 = vmatprep.subr.mxu0 %v1314
        %1425 = vmatpush1.msra.mxu0 %v1313
        %1426 = vmatprep.subr.mxu0 %v1318
        %1427 = vmatpush1.msra.mxu0 %v1317
        %1428 = vmatprep.subr.mxu0 %v1322
        %1429 = vmatpush1.msra.mxu0 %v1321
        %1430 = vmatprep.subr.mxu0 %v1326
        %1431 = vmatpush1.msra.mxu0 %v1325
        %1432 = vmatprep.subr.mxu0 %v1330
        %1433 = vmatpush1.msra.mxu0 %v1329
        %1434 = vmatprep.subr.mxu0 0.0
        %1435 = vmatpush1.msra.mxu0 0.0
        %1436 = vmatprep.subr.mxu0 0.0
        %1437 = vmatpush1.msra.mxu0 0.0
        %1438 = vmatprep.subr.mxu0 0.0
        %1439 = vmatpush1.msra.mxu0 0.0
        %1440 = vmatprep.subr.mxu0 0.0
        %1441 = vmatpush1.msra.mxu0 0.0
        %1442 = vmatprep.subr.mxu0 0.0
        %1443 = vmatpush1.msra.mxu0 0.0
        %1444 = vmatprep.subr.mxu0 0.0
        %1445 = vmatpush1.msra.mxu0 0.0
        %1446 = vmatprep.subr.mxu0 0.0
        %1447 = vmatpush1.msra.mxu0 0.0
        %1448 = vmatprep.subr.mxu0 0.0
        %1449 = vmatpush1.msra.mxu0 0.0
        %1450 = vmatprep.subr.mxu0 0.0
        %1451 = vmatpush1.msra.mxu0 0.0
        %1452 = vmatprep.subr.mxu0 0.0
        %1453 = vmatpush1.msra.mxu0 0.0
        %1454 = vmatprep.subr.mxu0 0.0
        %1455 = vmatpush1.msra.mxu0 0.0
        %1456 = vmatprep.subr.mxu0 0.0
        %1457 = vmatpush1.msra.mxu0 0.0
        %1458 = vmatprep.subr.mxu0 0.0
        %1459 = vmatpush1.msra.mxu0 0.0
        %1460 = vmatprep.subr.mxu0 0.0
        %1461 = vmatpush1.msra.mxu0 0.0
        %1462 = vmatprep.subr.mxu0 0.0
        %1463 = vmatpush1.msra.mxu0 0.0
        %1464 = vmatprep.subr.mxu0 0.0
        %1465 = vmatpush1.msra.mxu0 0.0
        %1466 = vmatprep.mubr.f32.mxu0 0.0
        %1467 = vmatmul.mubr.f32.gmra.mrb[0].mxu0 %v1266
        %v1468 = vpop.f32.mrb[0].mxu0
        %v1469 = vadd.f32 0.0, %v1468
        %v1470 = vpop.f32.mrb[0].mxu0
        %v1471 = vadd.f32 0.0, %v1470
        %1472 = vdwg.mxu0
        %v1477 = vcombine.low %v1398, %v1400
        %v1478 = vcombine.low %v1469, %v1471
        %v1480 = vunpack.c.l.s4 1983009808
        %v1481 = vunpack.c.0.s8 %v1480
        %v1482 = vlaneseq
        %v1483 = vshrl.u32 %v1482, 7
        %v1484 = vsub.s32 %v1481, %v1483
        %v1485 = vrot.slane %v1477, %v1484
        %v1487 = vunpack.c.l.s4 1983009808
        %v1488 = vunpack.c.0.s8 %v1487
        %v1489 = vlaneseq
        %v1490 = vshrl.u32 %v1489, 7
        %v1491 = vsub.s32 %v1488, %v1490
        %v1492 = vrot.slane %v1478, %v1491
        %v1493 = vcombine.low %v1485, %v1492
        %v1495 = vadd.f32 %v1265, %v1493
        %1496 = vst [vmem:[#allocation4] sm:$0xff] %v1495
        %p1497 = scmp.eq.s32.totalorder %s43, 3
        // Predicated region
        $region97: #{tpu_custom_call.1} parent=55 // pred_check
          %p1498 = pneg %p1497
        $region98: #{tpu_custom_call.1} parent=55 // pred_check_branch
          %1500 = sbr.rel (%p1498) target = $region100
        $region99: #{tpu_custom_call.1} parent=55 // pred_region
          %v1501 = vld [vmem:[#allocation2] sm:$0xff]
          %v1502 = vld [vmem:[#allocation3] sm:$0xff]
          %v1503 = vld [vmem:[#allocation4] sm:$0xff]
          %v1505 = vcombine.high %v1501, %v1501
          %v1507 = vunpack.c.l.s4 1983009808
          %v1508 = vunpack.c.0.s8 %v1507
          %v1509 = vlaneseq
          %v1510 = vshrl.u32 %v1509, 7
          %v1511 = vsub.s32 %v1508, %v1510
          %v1512 = vrot.slane %v1501, %v1511
          %v1514 = vunpack.c.l.s4 1983009808
          %v1515 = vunpack.c.0.s8 %v1514
          %v1516 = vlaneseq
          %v1517 = vshrl.u32 %v1516, 7
          %v1518 = vsub.s32 %v1515, %v1517
          %v1519 = vrot.slane %v1505, %v1518
          %v1520 = vcombine.high %v1512, %v1512
          %v1521 = vcombine.high %v1519, %v1519
          %v1527 = vcombine.high %v1502, %v1502
          %v1529 = vunpack.c.l.s4 1983009808
          %v1530 = vunpack.c.0.s8 %v1529
          %v1531 = vlaneseq
          %v1532 = vshrl.u32 %v1531, 7
          %v1533 = vsub.s32 %v1530, %v1532
          %v1534 = vrot.slane %v1502, %v1533
          %v1536 = vunpack.c.l.s4 1983009808
          %v1537 = vunpack.c.0.s8 %v1536
          %v1538 = vlaneseq
          %v1539 = vshrl.u32 %v1538, 7
          %v1540 = vsub.s32 %v1537, %v1539
          %v1541 = vrot.slane %v1527, %v1540
          %v1542 = vcombine.high %v1534, %v1534
          %v1543 = vcombine.high %v1541, %v1541
          %1548 = vmatprep.subr.mxu0 %v1542
          %1549 = vmatpush1.xpose.msra.mxu0 %v1534
          %1550 = vmatprep.subr.mxu0 0.0
          %1551 = vmatpush1.xpose.msra.mxu0 0.0
          %1552 = vmatprep.subr.mxu0 0.0
          %1553 = vmatpush1.xpose.msra.mxu0 0.0
          %1554 = vmatprep.subr.mxu0 0.0
          %1555 = vmatpush1.xpose.msra.mxu0 0.0
          %1556 = vmatprep.subr.mxu0 0.0
          %1557 = vmatpush1.xpose.msra.mxu0 0.0
          %1558 = vmatprep.subr.mxu0 0.0
          %1559 = vmatpush1.xpose.msra.mxu0 0.0
          %1560 = vmatprep.subr.mxu0 0.0
          %1561 = vmatpush1.xpose.msra.mxu0 0.0
          %1562 = vmatprep.subr.mxu0 0.0
          %1563 = vmatpush1.xpose.msra.mxu0 0.0
          %1564 = vmatprep.subr.mxu0 0.0
          %1565 = vmatpush1.xpose.msra.mxu0 0.0
          %1566 = vmatprep.subr.mxu0 0.0
          %1567 = vmatpush1.xpose.msra.mxu0 0.0
          %1568 = vmatprep.subr.mxu0 0.0
          %1569 = vmatpush1.xpose.msra.mxu0 0.0
          %1570 = vmatprep.subr.mxu0 0.0
          %1571 = vmatpush1.xpose.msra.mxu0 0.0
          %1572 = vmatprep.subr.mxu0 0.0
          %1573 = vmatpush1.xpose.msra.mxu0 0.0
          %1574 = vmatprep.subr.mxu0 0.0
          %1575 = vmatpush1.xpose.msra.mxu0 0.0
          %1576 = vmatprep.subr.mxu0 0.0
          %1577 = vmatpush1.xpose.msra.mxu0 0.0
          %1578 = vmatprep.subr.mxu0 0.0
          %1579 = vmatpush1.xpose.msra.mxu0 0.0
          %1580 = vmatprep.subr.mxu0 0.0
          %1581 = vmatpush1.xpose.msra.mxu0 0.0
          %1582 = vmatprep.subr.mxu0 0.0
          %1583 = vmatpush1.xpose.msra.mxu0 0.0
          %1584 = vmatprep.subr.mxu0 0.0
          %1585 = vmatpush1.xpose.msra.mxu0 0.0
          %1586 = vmatprep.subr.mxu0 0.0
          %1587 = vmatpush1.xpose.msra.mxu0 0.0
          %1588 = vmatprep.subr.mxu0 0.0
          %1589 = vmatpush1.xpose.msra.mxu0 0.0
          %1590 = vmatprep.subr.mxu0 0.0
          %1591 = vmatpush1.xpose.msra.mxu0 0.0
          %1592 = vmatprep.subr.mxu0 0.0
          %1593 = vmatpush1.xpose.msra.mxu0 0.0
          %1594 = vmatprep.subr.mxu0 0.0
          %1595 = vmatpush1.xpose.msra.mxu0 0.0
          %1596 = vmatprep.subr.mxu0 0.0
          %1597 = vmatpush1.xpose.msra.mxu0 0.0
          %1598 = vmatprep.subr.mxu0 0.0
          %1599 = vmatpush1.xpose.msra.mxu0 0.0
          %1600 = vmatprep.subr.mxu0 0.0
          %1601 = vmatpush1.xpose.msra.mxu0 0.0
          %1602 = vmatprep.subr.mxu0 0.0
          %1603 = vmatpush1.xpose.msra.mxu0 0.0
          %1604 = vmatprep.subr.mxu0 0.0
          %1605 = vmatpush1.xpose.msra.mxu0 0.0
          %1606 = vmatprep.subr.mxu0 0.0
          %1607 = vmatpush1.xpose.msra.mxu0 0.0
          %1608 = vmatprep.subr.mxu0 0.0
          %1609 = vmatpush1.xpose.msra.mxu0 0.0
          %1610 = vmatprep.subr.mxu0 0.0
          %1611 = vmatpush1.xpose.msra.mxu0 0.0
          %1612 = vmatprep.mubr.f32.mxu0 %v1520
          %1613 = vmatmul.mubr.f32.gmra.mrb[0].mxu0 %v1512
          %v1614 = vpop.f32.mrb[0].mxu0
          %v1615 = vadd.f32 0.0, %v1614
          %v1616 = vpop.f32.mrb[0].mxu0
          %1617 = vdwg.mxu0
          %1618 = vmatprep.subr.mxu0 %v1543
          %1619 = vmatpush1.xpose.msra.mxu0 %v1541
          %1620 = vmatprep.subr.mxu0 0.0
          %1621 = vmatpush1.xpose.msra.mxu0 0.0
          %1622 = vmatprep.subr.mxu0 0.0
          %1623 = vmatpush1.xpose.msra.mxu0 0.0
          %1624 = vmatprep.subr.mxu0 0.0
          %1625 = vmatpush1.xpose.msra.mxu0 0.0
          %1626 = vmatprep.subr.mxu0 0.0
          %1627 = vmatpush1.xpose.msra.mxu0 0.0
          %1628 = vmatprep.subr.mxu0 0.0
          %1629 = vmatpush1.xpose.msra.mxu0 0.0
          %1630 = vmatprep.subr.mxu0 0.0
          %1631 = vmatpush1.xpose.msra.mxu0 0.0
          %1632 = vmatprep.subr.mxu0 0.0
          %1633 = vmatpush1.xpose.msra.mxu0 0.0
          %1634 = vmatprep.subr.mxu0 0.0
          %1635 = vmatpush1.xpose.msra.mxu0 0.0
          %1636 = vmatprep.subr.mxu0 0.0
          %1637 = vmatpush1.xpose.msra.mxu0 0.0
          %1638 = vmatprep.subr.mxu0 0.0
          %1639 = vmatpush1.xpose.msra.mxu0 0.0
          %1640 = vmatprep.subr.mxu0 0.0
          %1641 = vmatpush1.xpose.msra.mxu0 0.0
          %1642 = vmatprep.subr.mxu0 0.0
          %1643 = vmatpush1.xpose.msra.mxu0 0.0
          %1644 = vmatprep.subr.mxu0 0.0
          %1645 = vmatpush1.xpose.msra.mxu0 0.0
          %1646 = vmatprep.subr.mxu0 0.0
          %1647 = vmatpush1.xpose.msra.mxu0 0.0
          %1648 = vmatprep.subr.mxu0 0.0
          %1649 = vmatpush1.xpose.msra.mxu0 0.0
          %1650 = vmatprep.subr.mxu0 0.0
          %1651 = vmatpush1.xpose.msra.mxu0 0.0
          %1652 = vmatprep.subr.mxu0 0.0
          %1653 = vmatpush1.xpose.msra.mxu0 0.0
          %1654 = vmatprep.subr.mxu0 0.0
          %1655 = vmatpush1.xpose.msra.mxu0 0.0
          %1656 = vmatprep.subr.mxu0 0.0
          %1657 = vmatpush1.xpose.msra.mxu0 0.0
          %1658 = vmatprep.subr.mxu0 0.0
          %1659 = vmatpush1.xpose.msra.mxu0 0.0
          %1660 = vmatprep.subr.mxu0 0.0
          %1661 = vmatpush1.xpose.msra.mxu0 0.0
          %1662 = vmatprep.subr.mxu0 0.0
          %1663 = vmatpush1.xpose.msra.mxu0 0.0
          %1664 = vmatprep.subr.mxu0 0.0
          %1665 = vmatpush1.xpose.msra.mxu0 0.0
          %1666 = vmatprep.subr.mxu0 0.0
          %1667 = vmatpush1.xpose.msra.mxu0 0.0
          %1668 = vmatprep.subr.mxu0 0.0
          %1669 = vmatpush1.xpose.msra.mxu0 0.0
          %1670 = vmatprep.subr.mxu0 0.0
          %1671 = vmatpush1.xpose.msra.mxu0 0.0
          %1672 = vmatprep.subr.mxu0 0.0
          %1673 = vmatpush1.xpose.msra.mxu0 0.0
          %1674 = vmatprep.subr.mxu0 0.0
          %1675 = vmatpush1.xpose.msra.mxu0 0.0
          %1676 = vmatprep.subr.mxu0 0.0
          %1677 = vmatpush1.xpose.msra.mxu0 0.0
          %1678 = vmatprep.subr.mxu0 0.0
          %1679 = vmatpush1.xpose.msra.mxu0 0.0
          %1680 = vmatprep.subr.mxu0 0.0
          %1681 = vmatpush1.xpose.msra.mxu0 0.0
          %1682 = vmatprep.mubr.f32.mxu0 %v1521
          %1683 = vmatmul.mubr.f32.gmra.mrb[0].mxu0 %v1519
          %v1684 = vpop.f32.mrb[0].mxu0
          %v1685 = vadd.f32 %v1615, %v1684
          %v1686 = vpop.f32.mrb[0].mxu0
          %1687 = vdwg.mxu0
          %v1688 = vmul.f32 %v1685, 22.627417
          %vm1689 = vcmask 9216
          %v1690 = vsel %vm1689, %v1688, -inf
          %1691 = vmax.xlane.f32.xlu0 %v1690
          %v1692 = vpop.xlane.xlu0 %1691
          %v1693 = vsub.f32 %v1688, %v1692
          %v1694 = vmul.f32 %v1693, 1.442695
          %v1695 = vpow.pop %v1694
          %v1696 = vsel %vm1689, %v1695, 0.0
          %1697 = vadd.xlane.f32.xlu0 %v1696
          %v1698 = vpop.xlane.xlu0 %1697
          %v1699 = vrcp.pop %v1698
          %v1700 = vmul.f32 %v1695, %v1699
          %v1702 = vcombine.high %v1503, %v1503
          %v1704 = vunpack.c.l.s4 1983009808
          %v1705 = vunpack.c.0.s8 %v1704
          %v1706 = vlaneseq
          %v1707 = vshrl.u32 %v1706, 7
          %v1708 = vsub.s32 %v1705, %v1707
          %v1709 = vrot.slane %v1503, %v1708
          %v1711 = vunpack.c.l.s4 1983009808
          %v1712 = vunpack.c.0.s8 %v1711
          %v1713 = vlaneseq
          %v1714 = vshrl.u32 %v1713, 7
          %v1715 = vsub.s32 %v1712, %v1714
          %v1716 = vrot.slane %v1702, %v1715
          %v1717 = vcombine.high %v1709, %v1709
          %v1718 = vcombine.high %v1716, %v1716
          %vm1719 = vcmask 15360
          %v1721 = vsel %vm1719, %v1700, 0
          %vm1723 = vcmask 1041408
          %v1724 = vsel %vm1723, %v1709, 0
          %v1726 = vsel %vm1723, %v1717, 0
          %v1728 = vsel %vm1723, %v1716, 0
          %v1730 = vsel %vm1723, %v1718, 0
          %1732 = vmatprep.subr.mxu0 %v1726
          %1733 = vmatpush1.msra.mxu0 %v1724
          %1734 = vmatprep.subr.mxu0 0.0
          %1735 = vmatpush1.msra.mxu0 0.0
          %1736 = vmatprep.subr.mxu0 0.0
          %1737 = vmatpush1.msra.mxu0 0.0
          %1738 = vmatprep.subr.mxu0 0.0
          %1739 = vmatpush1.msra.mxu0 0.0
          %1740 = vmatprep.subr.mxu0 0.0
          %1741 = vmatpush1.msra.mxu0 0.0
          %1742 = vmatprep.subr.mxu0 0.0
          %1743 = vmatpush1.msra.mxu0 0.0
          %1744 = vmatprep.subr.mxu0 0.0
          %1745 = vmatpush1.msra.mxu0 0.0
          %1746 = vmatprep.subr.mxu0 0.0
          %1747 = vmatpush1.msra.mxu0 0.0
          %1748 = vmatprep.subr.mxu0 0.0
          %1749 = vmatpush1.msra.mxu0 0.0
          %1750 = vmatprep.subr.mxu0 0.0
          %1751 = vmatpush1.msra.mxu0 0.0
          %1752 = vmatprep.subr.mxu0 0.0
          %1753 = vmatpush1.msra.mxu0 0.0
          %1754 = vmatprep.subr.mxu0 0.0
          %1755 = vmatpush1.msra.mxu0 0.0
          %1756 = vmatprep.subr.mxu0 0.0
          %1757 = vmatpush1.msra.mxu0 0.0
          %1758 = vmatprep.subr.mxu0 0.0
          %1759 = vmatpush1.msra.mxu0 0.0
          %1760 = vmatprep.subr.mxu0 0.0
          %1761 = vmatpush1.msra.mxu0 0.0
          %1762 = vmatprep.subr.mxu0 0.0
          %1763 = vmatpush1.msra.mxu0 0.0
          %1764 = vmatprep.subr.mxu0 0.0
          %1765 = vmatpush1.msra.mxu0 0.0
          %1766 = vmatprep.subr.mxu0 0.0
          %1767 = vmatpush1.msra.mxu0 0.0
          %1768 = vmatprep.subr.mxu0 0.0
          %1769 = vmatpush1.msra.mxu0 0.0
          %1770 = vmatprep.subr.mxu0 0.0
          %1771 = vmatpush1.msra.mxu0 0.0
          %1772 = vmatprep.subr.mxu0 0.0
          %1773 = vmatpush1.msra.mxu0 0.0
          %1774 = vmatprep.subr.mxu0 0.0
          %1775 = vmatpush1.msra.mxu0 0.0
          %1776 = vmatprep.subr.mxu0 0.0
          %1777 = vmatpush1.msra.mxu0 0.0
          %1778 = vmatprep.subr.mxu0 0.0
          %1779 = vmatpush1.msra.mxu0 0.0
          %1780 = vmatprep.subr.mxu0 0.0
          %1781 = vmatpush1.msra.mxu0 0.0
          %1782 = vmatprep.subr.mxu0 0.0
          %1783 = vmatpush1.msra.mxu0 0.0
          %1784 = vmatprep.subr.mxu0 0.0
          %1785 = vmatpush1.msra.mxu0 0.0
          %1786 = vmatprep.subr.mxu0 0.0
          %1787 = vmatpush1.msra.mxu0 0.0
          %1788 = vmatprep.subr.mxu0 0.0
          %1789 = vmatpush1.msra.mxu0 0.0
          %1790 = vmatprep.subr.mxu0 0.0
          %1791 = vmatpush1.msra.mxu0 0.0
          %1792 = vmatprep.subr.mxu0 0.0
          %1793 = vmatpush1.msra.mxu0 0.0
          %1794 = vmatprep.subr.mxu0 0.0
          %1795 = vmatpush1.msra.mxu0 0.0
          %1796 = vmatprep.mubr.f32.mxu0 0.0
          %1797 = vmatmul.mubr.f32.gmra.mrb[0].mxu0 %v1721
          %v1798 = vpop.f32.mrb[0].mxu0
          %v1799 = vadd.f32 0.0, %v1798
          %v1800 = vpop.f32.mrb[0].mxu0
          %v1801 = vadd.f32 0.0, %v1800
          %1802 = vdwg.mxu0
          %1803 = vmatprep.subr.mxu0 %v1730
          %1804 = vmatpush1.msra.mxu0 %v1728
          %1805 = vmatprep.subr.mxu0 0.0
          %1806 = vmatpush1.msra.mxu0 0.0
          %1807 = vmatprep.subr.mxu0 0.0
          %1808 = vmatpush1.msra.mxu0 0.0
          %1809 = vmatprep.subr.mxu0 0.0
          %1810 = vmatpush1.msra.mxu0 0.0
          %1811 = vmatprep.subr.mxu0 0.0
          %1812 = vmatpush1.msra.mxu0 0.0
          %1813 = vmatprep.subr.mxu0 0.0
          %1814 = vmatpush1.msra.mxu0 0.0
          %1815 = vmatprep.subr.mxu0 0.0
          %1816 = vmatpush1.msra.mxu0 0.0
          %1817 = vmatprep.subr.mxu0 0.0
          %1818 = vmatpush1.msra.mxu0 0.0
          %1819 = vmatprep.subr.mxu0 0.0
          %1820 = vmatpush1.msra.mxu0 0.0
          %1821 = vmatprep.subr.mxu0 0.0
          %1822 = vmatpush1.msra.mxu0 0.0
          %1823 = vmatprep.subr.mxu0 0.0
          %1824 = vmatpush1.msra.mxu0 0.0
          %1825 = vmatprep.subr.mxu0 0.0
          %1826 = vmatpush1.msra.mxu0 0.0
          %1827 = vmatprep.subr.mxu0 0.0
          %1828 = vmatpush1.msra.mxu0 0.0
          %1829 = vmatprep.subr.mxu0 0.0
          %1830 = vmatpush1.msra.mxu0 0.0
          %1831 = vmatprep.subr.mxu0 0.0
          %1832 = vmatpush1.msra.mxu0 0.0
          %1833 = vmatprep.subr.mxu0 0.0
          %1834 = vmatpush1.msra.mxu0 0.0
          %1835 = vmatprep.subr.mxu0 0.0
          %1836 = vmatpush1.msra.mxu0 0.0
          %1837 = vmatprep.subr.mxu0 0.0
          %1838 = vmatpush1.msra.mxu0 0.0
          %1839 = vmatprep.subr.mxu0 0.0
          %1840 = vmatpush1.msra.mxu0 0.0
          %1841 = vmatprep.subr.mxu0 0.0
          %1842 = vmatpush1.msra.mxu0 0.0
          %1843 = vmatprep.subr.mxu0 0.0
          %1844 = vmatpush1.msra.mxu0 0.0
          %1845 = vmatprep.subr.mxu0 0.0
          %1846 = vmatpush1.msra.mxu0 0.0
          %1847 = vmatprep.subr.mxu0 0.0
          %1848 = vmatpush1.msra.mxu0 0.0
          %1849 = vmatprep.subr.mxu0 0.0
          %1850 = vmatpush1.msra.mxu0 0.0
          %1851 = vmatprep.subr.mxu0 0.0
          %1852 = vmatpush1.msra.mxu0 0.0
          %1853 = vmatprep.subr.mxu0 0.0
          %1854 = vmatpush1.msra.mxu0 0.0
          %1855 = vmatprep.subr.mxu0 0.0
          %1856 = vmatpush1.msra.mxu0 0.0
          %1857 = vmatprep.subr.mxu0 0.0
          %1858 = vmatpush1.msra.mxu0 0.0
          %1859 = vmatprep.subr.mxu0 0.0
          %1860 = vmatpush1.msra.mxu0 0.0
          %1861 = vmatprep.subr.mxu0 0.0
          %1862 = vmatpush1.msra.mxu0 0.0
          %1863 = vmatprep.subr.mxu0 0.0
          %1864 = vmatpush1.msra.mxu0 0.0
          %1865 = vmatprep.subr.mxu0 0.0
          %1866 = vmatpush1.msra.mxu0 0.0
          %1867 = vmatprep.mubr.f32.mxu0 0.0
          %1868 = vmatmul.mubr.f32.gmra.mrb[0].mxu0 %v1721
          %v1869 = vpop.f32.mrb[0].mxu0
          %v1870 = vadd.f32 0.0, %v1869
          %v1871 = vpop.f32.mrb[0].mxu0
          %v1872 = vadd.f32 0.0, %v1871
          %1873 = vdwg.mxu0
          %v1878 = vcombine.low %v1799, %v1801
          %v1879 = vcombine.low %v1870, %v1872
          %v1881 = vunpack.c.l.s4 1983009808
          %v1882 = vunpack.c.0.s8 %v1881
          %v1883 = vlaneseq
          %v1884 = vshrl.u32 %v1883, 7
          %v1885 = vsub.s32 %v1882, %v1884
          %v1886 = vrot.slane %v1878, %v1885
          %v1888 = vunpack.c.l.s4 1983009808
          %v1889 = vunpack.c.0.s8 %v1888
          %v1890 = vlaneseq
          %v1891 = vshrl.u32 %v1890, 7
          %v1892 = vsub.s32 %v1889, %v1891
          %v1893 = vrot.slane %v1879, %v1892
          %v1894 = vcombine.low %v1886, %v1893
          %1896 = vst [vmem:[%s682] sm:$0xff] %v1894
        $region100: #{tpu_custom_call.1} parent=55 // pred_fallthru
          _
        %s1897 = sand.u32 %s304, 1
        %s1898 = scalar_lea.sflag [#allocation7], %s1897
        %s1899 = sand.u32 %s304, 1
        %s1900 = smul.addr %s1899, 8
        %s1901 = scalar_lea.vmem [#allocation20], %s1900
        // Predicated region
        $region101: #{tpu_custom_call.1} parent=55 // pred_check
          %p1902 = pneg %p314
        $region102: #{tpu_custom_call.1} parent=55 // pred_check_branch
          %1904 = sbr.rel (%p1902) target = $region104
        $region103: #{tpu_custom_call.1} parent=55 // pred_region
          %s1906 = ssub.s32 128, 128
          %1907 = vsyncadd %s1898, %s1906
          %s1908 = smul.addr %s42, 4
          %s1909 = smul.addr %s1908, 32
          %s1910 = scalar_lea.hbm %s9, %s1909
          %s1912 = sshll.u32 %s1901, 4
          %s1913 = int_to_ptr.vmem [resolvable:$true] %s1912
          %1915 = dma.vmem_to_hbm [thread:$0]  %s1913, 128, %s1910, %s1898
        $region104: #{tpu_custom_call.1} parent=55 // pred_fallthru
          _
      $region56: #{tpu_custom_call.1} parent=5 // pred_fallthru
        _
      %p1916 = scmp.le.s32.totalorder 2, %s33
      // Predicated region
      $region105: #{tpu_custom_call.1} parent=5 // pred_check
        %p1917 = pneg %p1916
      $region106: #{tpu_custom_call.1} parent=5 // pred_check_branch
        %1919 = sbr.rel (%p1917) target = $region108
      $region107: #{tpu_custom_call.1} parent=5 // pred_region
        %s1920 = ssub.s32 %s33, 2
        // Predicated region
        $region109: #{tpu_custom_call.1} parent=107 // pred_check
          %p1921 = pneg %p320
        $region110: #{tpu_custom_call.1} parent=107 // pred_check_branch
          %1923 = sbr.rel (%p1921) target = $region112
        $region111: #{tpu_custom_call.1} parent=107 // pred_region
          %s1924 = sand.u32 %s305, 1
          %s1925 = scalar_lea.sflag [#allocation7], %s1924
          %s1926 = sand.u32 %s305, 1
          %s1927 = smul.addr %s1926, 8
          %s1928 = scalar_lea.vmem [#allocation20], %s1927
          %1929 = dma.done %s1925, 128
        $region112: #{tpu_custom_call.1} parent=107 // pred_fallthru
          _
      $region108: #{tpu_custom_call.1} parent=5 // pred_fallthru
        _
    $region6: #{tpu_custom_call.1} parent=1 // loop_footer
      %s37 = sadd.s32 1, %s33
    $region7: #{tpu_custom_call.1} parent=1 // loop_footer_branch
      %32 = sbr.rel target = $region3
    $region8: #{tpu_custom_call.1} parent=1 // loop_exit
      _
    %1930 = vsyncpa [#allocation6], 1
    %s1931 = scalar_lea.sflag [#allocation6], 1
    %1932 = vsyncpa %s1931, 1
    %1933 = vsyncpa [#allocation9], 1
    %s1934 = scalar_lea.sflag [#allocation9], 1
    %1935 = vsyncpa %s1934, 1
    %1936 = vsyncpa [#allocation12], 1
    %s1937 = scalar_lea.sflag [#allocation12], 1
    %1938 = vsyncpa %s1937, 1
    %1939 = vsyncpa [#allocation15], 1
    %s1940 = scalar_lea.sflag [#allocation15], 1
    %1941 = vsyncpa %s1940, 1
    %1942 = vsyncpa [#allocation18], 1
    %s1943 = scalar_lea.sflag [#allocation18], 1
    %1944 = vsyncpa %s1943, 1
    %1945 = vsyncpa [#allocation7], 1
    %s1946 = scalar_lea.sflag [#allocation7], 1
    %1947 = vsyncpa %s1946, 1

</llo_original>
